<compile_context>
chip_gen: v6e
topology: v6e:2x2x1
jax: 0.10.0
libtpu: 0.0.40
codegen_flags: <defaults>
</compile_context>

<pallas_src>
import jax
import jax.numpy as jnp
from jax import lax
from jax.experimental import pallas as pl
from jax.experimental.pallas import tpu as pltpu


TK = 128  # RoIs per grid step (full MXU row tile on v5e; bump to 256 on v6e/v7x)


# ------------------------------ fused kernel --------------------------------

def _fused_roi_fc_kernel(s_ref, featT_ref, mask_ref, w1p_ref, b1_ref,
                         w2_ref, b2_ref, o_ref):
    """One grid step = one tile of TK RoIs.

    s_ref:     (P, TK, HW) bf16  bilinear sampling weights, pooled-point major
    featT_ref: (B, HW, C)  bf16  feature maps in HWC layout, VMEM-resident
    mask_ref:  (TK, B)     f32   per-RoI image one-hot (all-zero rows for padding)
    w1p_ref:   (P, C, F)   bf16  fc1 weight, permuted so step p uses w1p[p] (C, F)
    b1_ref:    (1, F)      f32
    w2_ref:    (F, F)      bf16
    b2_ref:    (1, F)      f32
    o_ref:     (TK, F)     f32   output tile
    """
    n_points = s_ref.shape[0]          # P = 49
    n_img = featT_ref.shape[0]         # B (1-2)
    tk, fdim = o_ref.shape

    masks = mask_ref[...]              # (TK, B) f32, loaded once

    def body(p, h1):
        s_p = s_ref[p]                                            # (TK, HW) bf16
        # RoIAlign for pooled point p: one tile-wide matmul per image, then
        # per-RoI image selection via the one-hot mask column (f32 math).
        pooled = masks[:, 0:1] * jnp.dot(
            s_p, featT_ref[0], preferred_element_type=jnp.float32)
        for b in range(1, n_img):                                 # static, B<=2
            pooled = pooled + masks[:, b:b + 1] * jnp.dot(
                s_p, featT_ref[b], preferred_element_type=jnp.float32)
        # fc1 contribution of pooled point p, accumulated in place (no (P,TK,F)
        # intermediate, no separate reduction).
        return h1 + jnp.dot(pooled.astype(jnp.bfloat16), w1p_ref[p],
                            preferred_element_type=jnp.float32)   # (TK, F) f32

    h1 = lax.fori_loop(0, n_points, body, jnp.zeros((tk, fdim), jnp.float32))
    h1 = jnp.maximum(h1 + b1_ref[...], 0.0)     # ReLU (dropout = identity, eval)
    h2 = jnp.dot(h1.astype(jnp.bfloat16), w2_ref[...],
                 preferred_element_type=jnp.float32) + b2_ref[...]
    o_ref[...] = jnp.maximum(h2, 0.0)           # ReLU (dropout = identity, eval)


def fused_roi_fc(featT, s_pkh, onehot, w1p, b1, w2, b2, *, tk=TK):
    """featT: (B, HW, C) bf16, s_pkh: (P, K_pad, HW) bf16, onehot: (K_pad, B) f32,
    w1p: (P, C, F) bf16, w2: (F, F) bf16  ->  (K_pad, F) f32."""
    B, HW, C = featT.shape
    P, k_pad, _ = s_pkh.shape
    F = w2.shape[0]
    assert k_pad % tk == 0
    n_tiles = k_pad // tk

    grid_spec = pltpu.PrefetchScalarGridSpec(
        num_scalar_prefetch=0,
        grid=(n_tiles,),
        in_specs=[
            pl.BlockSpec((P, tk, HW), lambda t: (0, t, 0)),   # S tile (streamed)
            pl.BlockSpec((B, HW, C), lambda t: (0, 0, 0)),    # resident features
            pl.BlockSpec((tk, B), lambda t: (t, 0)),          # per-RoI image one-hot
            pl.BlockSpec((P, C, F), lambda t: (0, 0, 0)),     # resident fc1 weight
            pl.BlockSpec((1, F), lambda t: (0, 0)),
            pl.BlockSpec((F, F), lambda t: (0, 0)),
            pl.BlockSpec((1, F), lambda t: (0, 0)),
        ],
        out_specs=pl.BlockSpec((tk, F), lambda t: (t, 0)),
    )
    return pl.pallas_call(
        _fused_roi_fc_kernel,
        out_shape=jax.ShapeDtypeStruct((k_pad, F), jnp.float32),
        grid_spec=grid_spec,
        compiler_params=pltpu.CompilerParams(
            dimension_semantics=("parallel",),
            vmem_limit_bytes=32 * 1024 * 1024),
    )(s_pkh, featT, onehot, w1p, b1, w2, b2)


# ------------------------ RoIAlign sampling weights -------------------------

def build_sampling_weights(rois, H, W, pooled, spatial_scale, sampling_ratio):
    """Dense bilinear sampling weights S: (K, pooled*pooled, H*W).
    Torchvision-style RoIAlign (aligned=False), sample points averaged per bin."""
    sr = sampling_ratio
    x1 = rois[:, 1] * spatial_scale
    y1 = rois[:, 2] * spatial_scale
    x2 = rois[:, 3] * spatial_scale
    y2 = rois[:, 4] * spatial_scale
    roi_w = jnp.maximum(x2 - x1, 1.0)
    roi_h = jnp.maximum(y2 - y1, 1.0)
    bin_w = roi_w / pooled
    bin_h = roi_h / pooled

    p = jnp.arange(pooled, dtype=jnp.float32)
    s = jnp.arange(sr, dtype=jnp.float32)
    y = (y1[:, None, None] + p[None, :, None] * bin_h[:, None, None]
         + (s[None, None, :] + 0.5) * bin_h[:, None, None] / sr)
    x = (x1[:, None, None] + p[None, :, None] * bin_w[:, None, None]
         + (s[None, None, :] + 0.5) * bin_w[:, None, None] / sr)

    y_ok = ((y >= -1.0) & (y <= H)).astype(jnp.float32)
    x_ok = ((x >= -1.0) & (x <= W)).astype(jnp.float32)
    yc = jnp.clip(y, 0.0, H - 1)
    xc = jnp.clip(x, 0.0, W - 1)

    gi = jnp.arange(H, dtype=jnp.float32)
    gj = jnp.arange(W, dtype=jnp.float32)
    wy = jnp.maximum(1.0 - jnp.abs(yc[..., None] - gi), 0.0) * y_ok[..., None]
    wx = jnp.maximum(1.0 - jnp.abs(xc[..., None] - gj), 0.0) * x_ok[..., None]
    wy = wy.mean(axis=2)  # (K, pooled, H)
    wx = wx.mean(axis=2)  # (K, pooled, W)
    S = wy[:, :, None, :, None] * wx[:, None, :, None, :]  # (K, ph, pw, H, W)
    return S.reshape(rois.shape[0], pooled * pooled, H * W)


# ------------------------------ Module wrapper -------------------------------

class NormalExtractorPallas:
    def __init__(self, key, in_channels=32, fc_out_channels=128,
                 roi_out_size=7, sample_num=2, featmap_strides=(4,),
                 finest_scale=56, num_fcs=2):
        assert num_fcs == 2  # fused kernel implements the default 2-fc head
        self.in_channels = in_channels
        self.fc_out_channels = fc_out_channels
        self.pooled = roi_out_size
        self.roi_area = roi_out_size * roi_out_size
        self.sample_num = sample_num
        self.featmap_strides = featmap_strides
        self.finest_scale = finest_scale

        fc_in = in_channels * self.roi_area
        k1, k2 = jax.random.split(key)
        # kaiming_init(distribution='uniform', a=1): bound = sqrt(3 / fan_in), bias = 0
        bnd1 = (3.0 / fc_in) ** 0.5
        bnd2 = (3.0 / fc_out_channels) ** 0.5
        # stored transposed relative to torch Linear.weight: (in, out),
        # row index = c * roi_area + p (matches torch flatten(1) of (K, C, 7, 7))
        self.w1 = jax.random.uniform(k1, (fc_in, fc_out_channels), jnp.float32, -bnd1, bnd1)
        self.b1 = jnp.zeros((1, fc_out_channels), jnp.float32)
        self.w2 = jax.random.uniform(k2, (fc_out_channels, fc_out_channels),
                                     jnp.float32, -bnd2, bnd2)
        self.b2 = jnp.zeros((1, fc_out_channels), jnp.float32)

        # Kernel operands: fc1 weight permuted to (P, C, F) so pooled point p
        # contracts against w1p[p] (C, F); bf16 for the MXU.
        self.w1p = jnp.transpose(
            self.w1.reshape(in_channels, self.roi_area, fc_out_channels),
            (1, 0, 2)).astype(jnp.bfloat16)
        self.w2_bf = self.w2.astype(jnp.bfloat16)

    def __call__(self, feats, rois):
        K = rois.shape[0]
        if K == 0:
            return jnp.zeros((0, self.fc_out_channels), jnp.float32)
        feat = feats[0].astype(jnp.float32)          # single-level path
        B, C, H, W = feat.shape
        spatial_scale = 1.0 / self.featmap_strides[0]

        S = build_sampling_weights(rois, H, W, self.pooled,
                                   spatial_scale, self.sample_num)      # (K, P, HW)
        batch_idx = rois[:, 0].astype(jnp.int32)
        onehot = (batch_idx[:, None] == jnp.arange(B)[None, :]).astype(jnp.float32)

        # pad RoIs to a multiple of the per-step tile (padded rows: S=0, mask=0).
        # NOTE(v7x): for megacore sharding pick K / TK so the tile count is >= 2.
        k_pad = ((K + TK - 1) // TK) * TK
        pad = k_pad - K
        if pad:
            S = jnp.concatenate(
                [S, jnp.zeros((pad,) + S.shape[1:], S.dtype)], axis=0)
            onehot = jnp.concatenate(
                [onehot, jnp.zeros((pad, B), onehot.dtype)], axis=0)

        s_pkh = jnp.transpose(S, (1, 0, 2)).astype(jnp.bfloat16)        # (P, K_pad, HW)
        featT = jnp.transpose(feat.reshape(B, C, H * W),
                              (0, 2, 1)).astype(jnp.bfloat16)           # (B, HW, C)

        out = fused_roi_fc(featT, s_pkh, onehot,
                           self.w1p, self.b1, self.w2_bf, self.b2, tk=TK)
        return out[:K]


# ----------------------------------- main ------------------------------------

if __name__ == "__main__":
    key = jax.random.PRNGKey(0)
    B, C, H, W = 2, 32, 16, 16
    stride = 4
    K = 200          # -> padded to 256 = 2 tiles of 128 (exercises padding + grid)
    F = 128

    kf, kb, kx, ky, kw, kh = jax.random.split(key, 6)
    feats = (jax.random.normal(kf, (B, C, H, W), jnp.float32),)  # NCHW, single level

    bidx = jax.random.randint(kb, (K,), 0, B).astype(jnp.float32)
    x1 = jax.random.uniform(kx, (K,), jnp.float32, 0.0, 40.0)
    y1 = jax.random.uniform(ky, (K,), jnp.float32, 0.0, 40.0)
    bw = jax.random.uniform(kw, (K,), jnp.float32, 4.0, 20.0)
    bh = jax.random.uniform(kh, (K,), jnp.float32, 4.0, 20.0)
    rois = jnp.stack([bidx, x1, y1, x1 + bw, y1 + bh], axis=-1)  # (K, 5)

    extractor = NormalExtractorPallas(jax.random.PRNGKey(42),
                                      in_channels=C, fc_out_channels=F,
                                      featmap_strides=(stride,))

    out = extractor(feats, rois)
    out = jax.block_until_ready(out)
    assert out.shape == (K, F)

    # pure-JAX reference of the same math, mirroring the kernel's bf16-operand /
    # f32-accumulate MXU path so the comparison is tight and deterministic.
    bf = lambda a: a.astype(jnp.bfloat16).astype(jnp.float32)
    S = build_sampling_weights(rois, H, W, 7, 1.0 / stride, 2)
    feat_sel = feats[0].reshape(B, C, H * W)[rois[:, 0].astype(jnp.int32)]
    roi_ref = jnp.einsum('kch,kph->kcp', bf(feat_sel), bf(S))     # f32 accumulate
    x_flat = bf(roi_ref.reshape(K, C * 49))
    ref = jnp.maximum(x_flat @ bf(extractor.w1) + extractor.b1, 0.0)
    ref = jnp.maximum(bf(ref) @ bf(extractor.w2) + extractor.b2, 0.0)
    assert jnp.allclose(out, ref, rtol=5e-3, atol=5e-3)

    print("KERNEL_OK")
</pallas_src>

<mosaic_0001>
module attributes {stable_mosaic.version = 11 : i64} {
  func.func @_fused_roi_fc_kernel(%arg0: i32, %arg1: memref<49x128x256xbf16, #tpu.memory_space<vmem>>, %arg2: memref<2x256x32xbf16, #tpu.memory_space<vmem>>, %arg3: memref<128x2xf32, #tpu.memory_space<vmem>>, %arg4: memref<49x32x128xbf16, #tpu.memory_space<vmem>>, %arg5: memref<1x128xf32, #tpu.memory_space<vmem>>, %arg6: memref<128x128xbf16, #tpu.memory_space<vmem>>, %arg7: memref<1x128xf32, #tpu.memory_space<vmem>>, %arg8: memref<128x128xf32, #tpu.memory_space<vmem>>) attributes {dimension_semantics = [#tpu.dimension_semantics<parallel>], iteration_bounds = array<i64: 2>, scalar_prefetch = 0 : i64, scratch_operands = 0 : i64, tpu.core_type = #tpu.core_type<tc>, window_params = [{transform_indices = @transform_0, window_bounds = array<i64: 49, 128, 256>}, {pipeline_mode = #tpu.pipeline_mode<synchronous>, transform_indices = @transform_1, window_bounds = array<i64: 2, 256, 32>}, {transform_indices = @transform_2, window_bounds = array<i64: 128, 2>}, {pipeline_mode = #tpu.pipeline_mode<synchronous>, transform_indices = @transform_3, window_bounds = array<i64: 49, 32, 128>}, {pipeline_mode = #tpu.pipeline_mode<synchronous>, transform_indices = @transform_4, window_bounds = array<i64: 1, 128>}, {pipeline_mode = #tpu.pipeline_mode<synchronous>, transform_indices = @transform_5, window_bounds = array<i64: 128, 128>}, {pipeline_mode = #tpu.pipeline_mode<synchronous>, transform_indices = @transform_6, window_bounds = array<i64: 1, 128>}, {transform_indices = @transform_7, window_bounds = array<i64: 128, 128>}]} {
    %c0 = arith.constant 0 : index
    %c0_0 = arith.constant 0 : index
    %0 = vector.load %arg3[%c0, %c0_0] : memref<128x2xf32, #tpu.memory_space<vmem>>, vector<128x2xf32>
    %cst = arith.constant 0.000000e+00 : f32
    %1 = vector.broadcast %cst : f32 to vector<128x128xf32>
    %c0_i32 = arith.constant 0 : i32
    %c49_i32 = arith.constant 49 : i32
    %2 = arith.addi %c0_i32, %c49_i32 : i32
    %c1_i32 = arith.constant 1 : i32
    %3 = scf.for %arg9 = %c0_i32 to %2 step %c1_i32 iter_args(%arg10 = %1) -> (vector<128x128xf32>)  : i32 {
      %18 = arith.index_cast %arg9 : i32 to index
      %c0_13 = arith.constant 0 : index
      %c0_14 = arith.constant 0 : index
      %19 = vector.load %arg1[%18, %c0_13, %c0_14] : memref<49x128x256xbf16, #tpu.memory_space<vmem>>, vector<1x128x256xbf16>
      %20 = vector.shape_cast %19 : vector<1x128x256xbf16> to vector<128x256xbf16>
      %21 = vector.extract_strided_slice %0 {offsets = [0, 0], sizes = [128, 1], strides = [1, 1]} : vector<128x2xf32> to vector<128x1xf32>
      %c0_15 = arith.constant 0 : index
      %c0_16 = arith.constant 0 : index
      %c0_17 = arith.constant 0 : index
      %22 = vector.load %arg2[%c0_15, %c0_16, %c0_17] : memref<2x256x32xbf16, #tpu.memory_space<vmem>>, vector<1x256x32xbf16>
      %23 = vector.shape_cast %22 : vector<1x256x32xbf16> to vector<256x32xbf16>
      %cst_18 = arith.constant dense<0.000000e+00> : vector<128x32xf32>
      %24 = tpu.matmul %20, %23, %cst_18 {dimension_numbers = #tpu.dot_dimension_numbers<[1], [0], [0], [1], [0, 0, 1, 1], [], []>} : vector<128x256xbf16>, vector<256x32xbf16>, vector<128x32xf32> -> vector<128x32xf32>
      %25 = vector.broadcast %21 : vector<128x1xf32> to vector<128x32xf32>
      %26 = arith.mulf %25, %24 : vector<128x32xf32>
      %27 = vector.extract_strided_slice %0 {offsets = [0, 1], sizes = [128, 1], strides = [1, 1]} : vector<128x2xf32> to vector<128x1xf32>
      %c1 = arith.constant 1 : index
      %c0_19 = arith.constant 0 : index
      %c0_20 = arith.constant 0 : index
      %28 = vector.load %arg2[%c1, %c0_19, %c0_20] : memref<2x256x32xbf16, #tpu.memory_space<vmem>>, vector<1x256x32xbf16>
      %29 = vector.shape_cast %28 : vector<1x256x32xbf16> to vector<256x32xbf16>
      %cst_21 = arith.constant dense<0.000000e+00> : vector<128x32xf32>
      %30 = tpu.matmul %20, %29, %cst_21 {dimension_numbers = #tpu.dot_dimension_numbers<[1], [0], [0], [1], [0, 0, 1, 1], [], []>} : vector<128x256xbf16>, vector<256x32xbf16>, vector<128x32xf32> -> vector<128x32xf32>
      %31 = vector.broadcast %27 : vector<128x1xf32> to vector<128x32xf32>
      %32 = arith.mulf %31, %30 : vector<128x32xf32>
      %33 = arith.addf %26, %32 : vector<128x32xf32>
      %34 = arith.truncf %33 : vector<128x32xf32> to vector<128x32xbf16>
      %35 = arith.index_cast %arg9 : i32 to index
      %c0_22 = arith.constant 0 : index
      %c0_23 = arith.constant 0 : index
      %36 = vector.load %arg4[%35, %c0_22, %c0_23] : memref<49x32x128xbf16, #tpu.memory_space<vmem>>, vector<1x32x128xbf16>
      %37 = vector.shape_cast %36 : vector<1x32x128xbf16> to vector<32x128xbf16>
      %cst_24 = arith.constant dense<0.000000e+00> : vector<128x128xf32>
      %38 = tpu.matmul %34, %37, %cst_24 {dimension_numbers = #tpu.dot_dimension_numbers<[1], [0], [0], [1], [0, 0, 1, 1], [], []>} : vector<128x32xbf16>, vector<32x128xbf16>, vector<128x128xf32> -> vector<128x128xf32>
      %39 = arith.addf %arg10, %38 : vector<128x128xf32>
      scf.yield %39 : vector<128x128xf32>
    }
    %c49_i32_1 = arith.constant 49 : i32
    %c0_2 = arith.constant 0 : index
    %c0_3 = arith.constant 0 : index
    %4 = vector.load %arg5[%c0_2, %c0_3] : memref<1x128xf32, #tpu.memory_space<vmem>>, vector<1x128xf32>
    %5 = vector.broadcast %4 : vector<1x128xf32> to vector<128x128xf32>
    %6 = arith.addf %3, %5 : vector<128x128xf32>
    %cst_4 = arith.constant 0.000000e+00 : f32
    %7 = vector.broadcast %cst_4 : f32 to vector<128x128xf32>
    %8 = arith.maximumf %6, %7 : vector<128x128xf32>
    %9 = arith.truncf %8 : vector<128x128xf32> to vector<128x128xbf16>
    %c0_5 = arith.constant 0 : index
    %c0_6 = arith.constant 0 : index
    %10 = vector.load %arg6[%c0_5, %c0_6] : memref<128x128xbf16, #tpu.memory_space<vmem>>, vector<128x128xbf16>
    %cst_7 = arith.constant dense<0.000000e+00> : vector<128x128xf32>
    %11 = tpu.matmul %9, %10, %cst_7 {dimension_numbers = #tpu.dot_dimension_numbers<[1], [0], [0], [1], [0, 0, 1, 1], [], []>} : vector<128x128xbf16>, vector<128x128xbf16>, vector<128x128xf32> -> vector<128x128xf32>
    %c0_8 = arith.constant 0 : index
    %c0_9 = arith.constant 0 : index
    %12 = vector.load %arg7[%c0_8, %c0_9] : memref<1x128xf32, #tpu.memory_space<vmem>>, vector<1x128xf32>
    %13 = vector.broadcast %12 : vector<1x128xf32> to vector<128x128xf32>
    %14 = arith.addf %11, %13 : vector<128x128xf32>
    %cst_10 = arith.constant 0.000000e+00 : f32
    %15 = vector.broadcast %cst_10 : f32 to vector<128x128xf32>
    %16 = arith.maximumf %14, %15 : vector<128x128xf32>
    %c0_11 = arith.constant 0 : index
    %c0_12 = arith.constant 0 : index
    %17 = vector.load %arg8[%c0_11, %c0_12] : memref<128x128xf32, #tpu.memory_space<vmem>>, vector<128x128xf32>
    tpu.vector_store %arg8[%c0_11, %c0_12], %16 {strides = array<i32>} : memref<128x128xf32, #tpu.memory_space<vmem>>, vector<128x128xf32>,
    return
  }
  func.func @transform_0(%arg0: i32) -> (i32, i32, i32) {
    %c0_i32 = arith.constant 0 : i32
    %c0_i32_0 = arith.constant 0 : i32
    %c0_i32_1 = arith.constant 0 : i32
    return %c0_i32, %arg0, %c0_i32_0 : i32, i32, i32
  }
  func.func @transform_1(%arg0: i32) -> (i32, i32, i32) {
    %c0_i32 = arith.constant 0 : i32
    %c0_i32_0 = arith.constant 0 : i32
    %c0_i32_1 = arith.constant 0 : i32
    %c0_i32_2 = arith.constant 0 : i32
    return %c0_i32, %c0_i32_0, %c0_i32_1 : i32, i32, i32
  }
  func.func @transform_2(%arg0: i32) -> (i32, i32) {
    %c0_i32 = arith.constant 0 : i32
    %c0_i32_0 = arith.constant 0 : i32
    return %arg0, %c0_i32 : i32, i32
  }
  func.func @transform_3(%arg0: i32) -> (i32, i32, i32) {
    %c0_i32 = arith.constant 0 : i32
    %c0_i32_0 = arith.constant 0 : i32
    %c0_i32_1 = arith.constant 0 : i32
    %c0_i32_2 = arith.constant 0 : i32
    return %c0_i32, %c0_i32_0, %c0_i32_1 : i32, i32, i32
  }
  func.func @transform_4(%arg0: i32) -> (i32, i32) {
    %c0_i32 = arith.constant 0 : i32
    %c0_i32_0 = arith.constant 0 : i32
    %c0_i32_1 = arith.constant 0 : i32
    return %c0_i32, %c0_i32_0 : i32, i32
  }
  func.func @transform_5(%arg0: i32) -> (i32, i32) {
    %c0_i32 = arith.constant 0 : i32
    %c0_i32_0 = arith.constant 0 : i32
    %c0_i32_1 = arith.constant 0 : i32
    return %c0_i32, %c0_i32_0 : i32, i32
  }
  func.func @transform_6(%arg0: i32) -> (i32, i32) {
    %c0_i32 = arith.constant 0 : i32
    %c0_i32_0 = arith.constant 0 : i32
    %c0_i32_1 = arith.constant 0 : i32
    return %c0_i32, %c0_i32_0 : i32, i32
  }
  func.func @transform_7(%arg0: i32) -> (i32, i32) {
    %c0_i32 = arith.constant 0 : i32
    %c0_i32_0 = arith.constant 0 : i32
    return %arg0, %c0_i32 : i32, i32
  }
}

</mosaic_0001>

<llo_original>
// kernel: tpu_custom_call.1
$region0: #{tpu_custom_call.1}
  #allocation0 [shape = 'u32[]', space=smem, size = 0x4, offset = 0x4, fixed_abs, tag = 'smem constant byte address 0x4 - core index']
  #allocation1 [shape = 'u32[144,128]{1,0:T(1,128)}', space=vmem, size = 0x12000, scoped, tag = 'internal scratch']
  #allocation12 [shape = 's32[]', space=sflag, size = 0x4, offset = 0, fixed_abs, tag = 'sflag constant byte address 0x0 - dummy sync flag']
  %s0 = inlined_call_operand.hbm [shape: bf16[49,256,256], index: 0, kind: input, shape index: {}]
  %s1 = inlined_call_operand.vmem [shape: bf16[2,256,32], index: 1, kind: input, shape index: {}]
  %s2 = inlined_call_operand.vmem [shape: f32[256,2], index: 2, kind: input, shape index: {}]
  %s3 = inlined_call_operand.hbm [shape: bf16[49,32,128], index: 3, kind: input, shape index: {}]
  %s4 = inlined_call_operand.hbm [shape: f32[1,128], index: 4, kind: input, shape index: {}]
  %s5 = inlined_call_operand.hbm [shape: bf16[128,128], index: 5, kind: input, shape index: {}]
  %s6 = inlined_call_operand.hbm [shape: f32[1,128], index: 6, kind: input, shape index: {}]
  %s7 = inlined_call_operand.hbm [shape: f32[256,128], index: 7, kind: output, shape index: {}]
  %s8 = sld [smem:[#allocation0]]
  $region88: #{tpu_custom_call.1} parent=0
    _
  %s10 = ssub.s32 1, %s8
  %s11 = scalar_select 0, %s10, %s8
  $region1: #{tpu_custom_call.1} parent=0
    #allocation2 [shape = 'u8[6422528]{0}', space=vmem, size = 0x620000, scoped, tag = 'input window, operand 0']
    #allocation3 [shape = 's32[2]{0}', space=sflag, size = 0x8, scoped, tag = 'scoped memory for tpu_custom_call.1']
    #allocation4 [shape = 's32[2]{0}', space=sflag, size = 0x8, scoped, tag = 'scoped memory for tpu_custom_call.1']
    #allocation5 [shape = 'u8[401408]{0}', space=vmem, size = 0x62000, scoped, tag = 'input window, operand 3, single buffered']
    #allocation6 [shape = 's32[1]{0}', space=sflag, size = 0x4, scoped, tag = 'scoped memory for tpu_custom_call.1']
    #allocation7 [shape = 'u8[512]{0}', space=vmem, size = 0x400, scoped, tag = 'input window, operand 4, single buffered']
    #allocation8 [shape = 'u8[32768]{0}', space=vmem, size = 0x8000, scoped, tag = 'input window, operand 5, single buffered']
    #allocation9 [shape = 's32[1]{0}', space=sflag, size = 0x4, scoped, tag = 'scoped memory for tpu_custom_call.1']
    #allocation10 [shape = 'u8[512]{0}', space=vmem, size = 0x400, scoped, tag = 'input window, operand 6, single buffered']
    #allocation11 [shape = 'u8[131072]{0}', space=vmem, size = 0x20000, scoped, tag = 'output window, operand 0']
    %12 = vsyncpa [#allocation3], 0
    %s13 = scalar_lea.sflag [#allocation3], 1
    %14 = vsyncpa %s13, 0
    %15 = vsyncpa [#allocation6], 0
    %16 = vsyncpa [#allocation9], 0
    %17 = vsyncpa [#allocation4], 0
    %s18 = scalar_lea.sflag [#allocation4], 1
    %19 = vsyncpa %s18, 0
    loop: start=0, step=1, limit=4
    $region2: #{tpu_custom_call.1} parent=1 // loop_pre_header
      _
    $region3: #{tpu_custom_call.1} parent=1 // loop_header
      %s21 = sphi 0, %s25
      %p22 = scmp.ge.s32.totalorder %s21, 4
      %s31 = sphi 0, %s33
      %s34 = sphi 0, %s31
      %s35 = sphi 0, %s34
      %s51 = sphi 0, %s35
      %s55 = sphi 0, %s55
      %s57 = sphi 0, %s55
      %s58 = sphi 0, %s57
      %s72 = sphi 0, %s58
      %s78 = sphi 0, %s80
      %s81 = sphi 0, %s78
      %s82 = sphi 0, %s81
      %s98 = sphi 0, %s82
      %s102 = sphi 0, %s102
      %s104 = sphi 0, %s102
      %s105 = sphi 0, %s104
      %s119 = sphi 0, %s105
      %s123 = sphi 0, %s123
      %s125 = sphi 0, %s123
      %s126 = sphi 0, %s125
      %s140 = sphi 0, %s126
      %s144 = sphi 0, %s144
      %s146 = sphi 0, %s144
      %s147 = sphi 0, %s146
      %s161 = sphi 0, %s147
      %s165 = sphi 0, %s165
      %s167 = sphi 0, %s165
      %s168 = sphi 0, %s167
      %s182 = sphi 0, %s168
      %s188 = sphi 0, %s190
      %s191 = sphi 0, %s188
      %s192 = sphi 0, %s191
      %s208 = sphi 0, %s192
    $region4: #{tpu_custom_call.1} parent=1 // loop_header_branch
      %24 = sbr.rel (%p22) target = $region8
    $region5: #{tpu_custom_call.1} parent=1 // loop_body
      %s26 = ssub.s32 %s21, 1
      %s27 = ssub.s32 %s21, 2
      %s28 = sadd.s32 %s21, 1
      %s29 = ssub.s32 %s21, %s28
      %p30 = scmp.eq.s32.totalorder %s29, 0
      %s32 = sadd.s32 %s31, 1
      %s33 = scalar_select %p30, %s31, %s32
      %p36 = pneg %p30
      %p37 = scmp.eq.s32.totalorder %s21, 1
      %p38 = por %p36, %p37
      %p39 = scmp.ne.s32.totalorder %s31, %s34
      %p40 = scmp.eq.s32.totalorder %s21, 0
      %p41 = por %p39, %p40
      %p42 = scmp.ne.s32.totalorder %s31, %s34
      %p43 = scmp.eq.s32.totalorder %s26, 1
      %p44 = por %p42, %p43
      %p45 = scmp.ne.s32.totalorder %s34, %s35
      %p46 = scmp.eq.s32.totalorder %s26, 0
      %p47 = por %p45, %p46
      %p48 = scmp.ne.s32.totalorder %s34, %s35
      %p49 = scmp.eq.s32.totalorder %s27, 1
      %p50 = por %p48, %p49
      %p52 = scmp.ne.s32.totalorder %s35, %s51
      %p53 = scmp.eq.s32.totalorder %s27, 0
      %p54 = por %p52, %p53
      %s56 = sadd.s32 %s55, 1
      %p59 = scmp.eq.s32.totalorder %s21, 1
      %p60 = scmp.ne.s32.totalorder %s55, %s57
      %p61 = scmp.eq.s32.totalorder %s21, 0
      %p62 = por %p60, %p61
      %p63 = scmp.ne.s32.totalorder %s55, %s57
      %p64 = scmp.eq.s32.totalorder %s26, 1
      %p65 = por %p63, %p64
      %p66 = scmp.ne.s32.totalorder %s57, %s58
      %p67 = scmp.eq.s32.totalorder %s26, 0
      %p68 = por %p66, %p67
      %p69 = scmp.ne.s32.totalorder %s57, %s58
      %p70 = scmp.eq.s32.totalorder %s27, 1
      %p71 = por %p69, %p70
      %p73 = scmp.ne.s32.totalorder %s58, %s72
      %p74 = scmp.eq.s32.totalorder %s27, 0
      %p75 = por %p73, %p74
      %s76 = ssub.s32 %s21, %s28
      %p77 = scmp.eq.s32.totalorder %s76, 0
      %s79 = sadd.s32 %s78, 1
      %s80 = scalar_select %p77, %s78, %s79
      %p83 = pneg %p77
      %p84 = scmp.eq.s32.totalorder %s21, 1
      %p85 = por %p83, %p84
      %p86 = scmp.ne.s32.totalorder %s78, %s81
      %p87 = scmp.eq.s32.totalorder %s21, 0
      %p88 = por %p86, %p87
      %p89 = scmp.ne.s32.totalorder %s78, %s81
      %p90 = scmp.eq.s32.totalorder %s26, 1
      %p91 = por %p89, %p90
      %p92 = scmp.ne.s32.totalorder %s81, %s82
      %p93 = scmp.eq.s32.totalorder %s26, 0
      %p94 = por %p92, %p93
      %p95 = scmp.ne.s32.totalorder %s81, %s82
      %p96 = scmp.eq.s32.totalorder %s27, 1
      %p97 = por %p95, %p96
      %p99 = scmp.ne.s32.totalorder %s82, %s98
      %p100 = scmp.eq.s32.totalorder %s27, 0
      %p101 = por %p99, %p100
      %s103 = sadd.s32 %s102, 1
      %p106 = scmp.eq.s32.totalorder %s21, 1
      %p107 = scmp.ne.s32.totalorder %s102, %s104
      %p108 = scmp.eq.s32.totalorder %s21, 0
      %p109 = por %p107, %p108
      %p110 = scmp.ne.s32.totalorder %s102, %s104
      %p111 = scmp.eq.s32.totalorder %s26, 1
      %p112 = por %p110, %p111
      %p113 = scmp.ne.s32.totalorder %s104, %s105
      %p114 = scmp.eq.s32.totalorder %s26, 0
      %p115 = por %p113, %p114
      %p116 = scmp.ne.s32.totalorder %s104, %s105
      %p117 = scmp.eq.s32.totalorder %s27, 1
      %p118 = por %p116, %p117
      %p120 = scmp.ne.s32.totalorder %s105, %s119
      %p121 = scmp.eq.s32.totalorder %s27, 0
      %p122 = por %p120, %p121
      %s124 = sadd.s32 %s123, 1
      %p127 = scmp.eq.s32.totalorder %s21, 1
      %p128 = scmp.ne.s32.totalorder %s123, %s125
      %p129 = scmp.eq.s32.totalorder %s21, 0
      %p130 = por %p128, %p129
      %p131 = scmp.ne.s32.totalorder %s123, %s125
      %p132 = scmp.eq.s32.totalorder %s26, 1
      %p133 = por %p131, %p132
      %p134 = scmp.ne.s32.totalorder %s125, %s126
      %p135 = scmp.eq.s32.totalorder %s26, 0
      %p136 = por %p134, %p135
      %p137 = scmp.ne.s32.totalorder %s125, %s126
      %p138 = scmp.eq.s32.totalorder %s27, 1
      %p139 = por %p137, %p138
      %p141 = scmp.ne.s32.totalorder %s126, %s140
      %p142 = scmp.eq.s32.totalorder %s27, 0
      %p143 = por %p141, %p142
      %s145 = sadd.s32 %s144, 1
      %p148 = scmp.eq.s32.totalorder %s21, 1
      %p149 = scmp.ne.s32.totalorder %s144, %s146
      %p150 = scmp.eq.s32.totalorder %s21, 0
      %p151 = por %p149, %p150
      %p152 = scmp.ne.s32.totalorder %s144, %s146
      %p153 = scmp.eq.s32.totalorder %s26, 1
      %p154 = por %p152, %p153
      %p155 = scmp.ne.s32.totalorder %s146, %s147
      %p156 = scmp.eq.s32.totalorder %s26, 0
      %p157 = por %p155, %p156
      %p158 = scmp.ne.s32.totalorder %s146, %s147
      %p159 = scmp.eq.s32.totalorder %s27, 1
      %p160 = por %p158, %p159
      %p162 = scmp.ne.s32.totalorder %s147, %s161
      %p163 = scmp.eq.s32.totalorder %s27, 0
      %p164 = por %p162, %p163
      %s166 = sadd.s32 %s165, 1
      %p169 = scmp.eq.s32.totalorder %s21, 1
      %p170 = scmp.ne.s32.totalorder %s165, %s167
      %p171 = scmp.eq.s32.totalorder %s21, 0
      %p172 = por %p170, %p171
      %p173 = scmp.ne.s32.totalorder %s165, %s167
      %p174 = scmp.eq.s32.totalorder %s26, 1
      %p175 = por %p173, %p174
      %p176 = scmp.ne.s32.totalorder %s167, %s168
      %p177 = scmp.eq.s32.totalorder %s26, 0
      %p178 = por %p176, %p177
      %p179 = scmp.ne.s32.totalorder %s167, %s168
      %p180 = scmp.eq.s32.totalorder %s27, 1
      %p181 = por %p179, %p180
      %p183 = scmp.ne.s32.totalorder %s168, %s182
      %p184 = scmp.eq.s32.totalorder %s27, 0
      %p185 = por %p183, %p184
      %s186 = ssub.s32 %s21, %s28
      %p187 = scmp.eq.s32.totalorder %s186, 0
      %s189 = sadd.s32 %s188, 1
      %s190 = scalar_select %p187, %s188, %s189
      %p193 = pneg %p187
      %p194 = scmp.eq.s32.totalorder %s21, 1
      %p195 = por %p193, %p194
      %p196 = scmp.ne.s32.totalorder %s188, %s191
      %p197 = scmp.eq.s32.totalorder %s21, 0
      %p198 = por %p196, %p197
      %p199 = scmp.ne.s32.totalorder %s188, %s191
      %p200 = scmp.eq.s32.totalorder %s26, 1
      %p201 = por %p199, %p200
      %p202 = scmp.ne.s32.totalorder %s191, %s192
      %p203 = scmp.eq.s32.totalorder %s26, 0
      %p204 = por %p202, %p203
      %p205 = scmp.ne.s32.totalorder %s191, %s192
      %p206 = scmp.eq.s32.totalorder %s27, 1
      %p207 = por %p205, %p206
      %p209 = scmp.ne.s32.totalorder %s192, %s208
      %p210 = scmp.eq.s32.totalorder %s27, 0
      %p211 = por %p209, %p210
      %p212 = scmp.le.s32.totalorder 1, %s21
      %p213 = scmp.lt.s32.totalorder %s21, 3
      %p214 = pnand %p212, %p213
      %p215 = pneg %p214
      // Predicated region
      $region9: #{tpu_custom_call.1} parent=5 // pred_check
        _
      $region10: #{tpu_custom_call.1} parent=5 // pred_check_branch
        %217 = sbr.rel (%p214) target = $region12
      $region11: #{tpu_custom_call.1} parent=5 // pred_region
        %s218 = ssub.s32 %s21, 1
        // Predicated region
        $region13: #{tpu_custom_call.1} parent=11 // pred_check
          %p219 = pneg %p68
        $region14: #{tpu_custom_call.1} parent=11 // pred_check_branch
          %221 = sbr.rel (%p219) target = $region16
        $region15: #{tpu_custom_call.1} parent=11 // pred_region
          _
        $region16: #{tpu_custom_call.1} parent=11 // pred_fallthru
          _
        // Predicated region
        $region17: #{tpu_custom_call.1} parent=11 // pred_check
          %p222 = pneg %p115
        $region18: #{tpu_custom_call.1} parent=11 // pred_check_branch
          %224 = sbr.rel (%p222) target = $region20
        $region19: #{tpu_custom_call.1} parent=11 // pred_region
          %s226 = ssub.s32 12544, 12544
          %227 = vsyncadd [#allocation6], %s226
          %s228 = sshll.u32 [#allocation5], 4
          %s229 = int_to_ptr.vmem [resolvable:$true] %s228
          %234 = dma.hbm_to_vmem [thread:$0]  %s3, 12544, %s229, [#allocation6], 64, 64, 4
        $region20: #{tpu_custom_call.1} parent=11 // pred_fallthru
          _
        // Predicated region
        $region21: #{tpu_custom_call.1} parent=11 // pred_check
          %p235 = pneg %p136
        $region22: #{tpu_custom_call.1} parent=11 // pred_check_branch
          %237 = sbr.rel (%p235) target = $region24
        $region23: #{tpu_custom_call.1} parent=11 // pred_region
          %s239 = ssub.s32 16, 16
          %240 = vsyncadd [#allocation6], %s239
          %s242 = sshll.u32 [#allocation7], 4
          %s243 = int_to_ptr.vmem [resolvable:$true] %s242
          %245 = dma.hbm_to_vmem [thread:$0]  %s4, 16, %s243, [#allocation6]
        $region24: #{tpu_custom_call.1} parent=11 // pred_fallthru
          _
        // Predicated region
        $region25: #{tpu_custom_call.1} parent=11 // pred_check
          %p246 = pneg %p157
        $region26: #{tpu_custom_call.1} parent=11 // pred_check_branch
          %248 = sbr.rel (%p246) target = $region28
        $region27: #{tpu_custom_call.1} parent=11 // pred_region
          %s250 = ssub.s32 1024, 1024
          %251 = vsyncadd [#allocation9], %s250
          %s252 = sshll.u32 [#allocation8], 4
          %s253 = int_to_ptr.vmem [resolvable:$true] %s252
          %258 = dma.hbm_to_vmem [thread:$0]  %s5, 1024, %s253, [#allocation9], 64, 64, 4
        $region28: #{tpu_custom_call.1} parent=11 // pred_fallthru
          _
        // Predicated region
        $region29: #{tpu_custom_call.1} parent=11 // pred_check
          %p259 = pneg %p178
        $region30: #{tpu_custom_call.1} parent=11 // pred_check_branch
          %261 = sbr.rel (%p259) target = $region32
        $region31: #{tpu_custom_call.1} parent=11 // pred_region
          %s263 = ssub.s32 16, 16
          %264 = vsyncadd [#allocation9], %s263
          %s266 = sshll.u32 [#allocation10], 4
          %s267 = int_to_ptr.vmem [resolvable:$true] %s266
          %269 = dma.hbm_to_vmem [thread:$0]  %s6, 16, %s267, [#allocation9]
        $region32: #{tpu_custom_call.1} parent=11 // pred_fallthru
          _
      $region12: #{tpu_custom_call.1} parent=5 // pred_fallthru
        _
      %p270 = scmp.lt.s32.totalorder %s21, 2
      // Predicated region
      $region33: #{tpu_custom_call.1} parent=5 // pred_check
        %p271 = pneg %p270
      $region34: #{tpu_custom_call.1} parent=5 // pred_check_branch
        %273 = sbr.rel (%p271) target = $region36
      $region35: #{tpu_custom_call.1} parent=5 // pred_region
        // Predicated region
        $region37: #{tpu_custom_call.1} parent=35 // pred_check
          %p274 = pneg %p41
        $region38: #{tpu_custom_call.1} parent=35 // pred_check_branch
          %276 = sbr.rel (%p274) target = $region40
        $region39: #{tpu_custom_call.1} parent=35 // pred_region
          #allocation13 [shape = 'u32[6]{0}', space=smem, size = 0x18, scoped, tag = 'DMA stride descriptor']
          %s277 = sand.u32 %s31, 1
          %s278 = scalar_lea.sflag [#allocation3], %s277
          %s279 = sand.u32 %s31, 1
          %s280 = smul.addr %s279, 6272
          %s281 = scalar_lea.vmem [#allocation2], %s280
          %s282 = smul.u32 16, %s21
          %s284 = ssub.s32 100352, 100352
          %285 = vsyncadd %s278, %s284
          %s286 = smul.addr %s282, 2
          %s287 = smul.addr %s286, 64
          %s288 = scalar_lea.hbm %s0, %s287
          %s290 = sshll.u32 1, 14
          %s291 = sxor.u32 4294967295, %s290
          %s293 = sld [smem:[#allocation0]]
          %s294 = sadd.s32 2, %s293
          %s296 = sshll.u32 7, 26
          %s297 = sxor.u32 4294967295, %s296
          %s298 = sand.u32 0, %s297
          %s299 = sshll.u32 %s294, 26
          %s300 = sor.u32 %s298, %s299
          %s301 = sshll.u32 %s281, 4
          %s302 = int_to_ptr.vmem [resolvable:$true] %s301
          %308 = sst [smem:[#allocation13]] 4096
          %s309 = scalar_lea.smem [#allocation13], 1
          %310 = sst [smem:[%s309]] 2048
          %s311 = scalar_lea.smem [#allocation13], 2
          %312 = sst [smem:[%s311]] 16
          %s313 = scalar_lea.smem [#allocation13], 3
          %314 = sst [smem:[%s313]] 128
          %s315 = scalar_lea.smem [#allocation13], 4
          %316 = sst [smem:[%s315]] 128
          %s317 = scalar_lea.smem [#allocation13], 5
          %318 = sst [smem:[%s317]] 8
          %320 = dma.general %s288, 100352, %s302, %s278, 131072, [#allocation13], %s300, 0
        $region40: #{tpu_custom_call.1} parent=35 // pred_fallthru
          _
        // Predicated region
        $region41: #{tpu_custom_call.1} parent=35 // pred_check
          %p321 = pneg %p88
        $region42: #{tpu_custom_call.1} parent=35 // pred_check_branch
          %323 = sbr.rel (%p321) target = $region44
        $region43: #{tpu_custom_call.1} parent=35 // pred_region
          %s324 = smul.u32 16, %s21
          %p325 = scmp.lt.s32.totalorder %s324, 31
          %s326 = scalar_select %p325, %s324, 31
          %s327 = smul.addr %s326, 8
          %s328 = scalar_lea.vmem %s2, %s327
          %s329 = smul.u32 16, %s21
        $region44: #{tpu_custom_call.1} parent=35 // pred_fallthru
          _
      $region36: #{tpu_custom_call.1} parent=5 // pred_fallthru
        _
      %p330 = scmp.le.s32.totalorder 1, %s21
      %p331 = scmp.lt.s32.totalorder %s21, 3
      %p332 = pnand %p330, %p331
      %p333 = pneg %p332
      // Predicated region
      $region45: #{tpu_custom_call.1} parent=5 // pred_check
        _
      $region46: #{tpu_custom_call.1} parent=5 // pred_check_branch
        %335 = sbr.rel (%p332) target = $region48
      $region47: #{tpu_custom_call.1} parent=5 // pred_region
        %s336 = ssub.s32 %s21, 1
        %s337 = sand.u32 %s34, 1
        %s338 = scalar_lea.sflag [#allocation3], %s337
        %s339 = sand.u32 %s34, 1
        %s340 = smul.addr %s339, 6272
        %s341 = scalar_lea.vmem [#allocation2], %s340
        // Predicated region
        $region49: #{tpu_custom_call.1} parent=47 // pred_check
          %p342 = pneg %p47
        $region50: #{tpu_custom_call.1} parent=47 // pred_check_branch
          %344 = sbr.rel (%p342) target = $region52
        $region51: #{tpu_custom_call.1} parent=47 // pred_region
          %345 = dma.done %s338, 100352
        $region52: #{tpu_custom_call.1} parent=47 // pred_fallthru
          _
        // Predicated region
        $region53: #{tpu_custom_call.1} parent=47 // pred_check
          %p346 = pneg %p115
        $region54: #{tpu_custom_call.1} parent=47 // pred_check_branch
          %348 = sbr.rel (%p346) target = $region56
        $region55: #{tpu_custom_call.1} parent=47 // pred_region
          %349 = dma.done [#allocation6], 12544
        $region56: #{tpu_custom_call.1} parent=47 // pred_fallthru
          _
        // Predicated region
        $region57: #{tpu_custom_call.1} parent=47 // pred_check
          %p350 = pneg %p136
        $region58: #{tpu_custom_call.1} parent=47 // pred_check_branch
          %352 = sbr.rel (%p350) target = $region60
        $region59: #{tpu_custom_call.1} parent=47 // pred_region
          %353 = dma.done [#allocation6], 16
        $region60: #{tpu_custom_call.1} parent=47 // pred_fallthru
          _
        // Predicated region
        $region61: #{tpu_custom_call.1} parent=47 // pred_check
          %p354 = pneg %p157
        $region62: #{tpu_custom_call.1} parent=47 // pred_check_branch
          %356 = sbr.rel (%p354) target = $region64
        $region63: #{tpu_custom_call.1} parent=47 // pred_region
          %357 = dma.done [#allocation9], 1024
        $region64: #{tpu_custom_call.1} parent=47 // pred_fallthru
          _
        // Predicated region
        $region65: #{tpu_custom_call.1} parent=47 // pred_check
          %p358 = pneg %p178
        $region66: #{tpu_custom_call.1} parent=47 // pred_check_branch
          %360 = sbr.rel (%p358) target = $region68
        $region67: #{tpu_custom_call.1} parent=47 // pred_region
          %361 = dma.done [#allocation9], 16
        $region68: #{tpu_custom_call.1} parent=47 // pred_fallthru
          _
        %s362 = sand.u32 %s34, 1
        %s363 = scalar_lea.sflag [#allocation3], %s362
        %s364 = sand.u32 %s34, 1
        %s365 = smul.addr %s364, 6272
        %s366 = scalar_lea.vmem [#allocation2], %s365
        %p367 = pneg %p47
        %p368 = pneg %p44
        %p369 = pneg %p68
        %p370 = pneg %p65
        %s371 = smul.u32 16, %s26
        %p372 = scmp.lt.s32.totalorder %s371, 31
        %s373 = scalar_select %p372, %s371, 31
        %s374 = smul.addr %s373, 8
        %s375 = scalar_lea.vmem %s2, %s374
        %p376 = pneg %p94
        %p377 = pneg %p91
        %p378 = pneg %p115
        %p379 = pneg %p112
        %p380 = pneg %p136
        %p381 = pneg %p133
        %p382 = pneg %p157
        %p383 = pneg %p154
        %p384 = pneg %p178
        %p385 = pneg %p175
        %p386 = pneg %p204
        %p387 = pneg %p201
        %s388 = sand.u32 %s191, 1
        %s389 = scalar_lea.sflag [#allocation4], %s388
        %s390 = sand.u32 %s191, 1
        %s391 = smul.addr %s390, 128
        %s392 = scalar_lea.vmem [#allocation11], %s391
        %s393 = smul.u32 16, %s26
        %s394 = smul.u32 16, %s26
        %p395 = scmp.lt.s32.totalorder %s394, 31
        %s396 = scalar_select %p395, %s394, 31
        %s397 = smul.addr %s396, 8
        %s398 = scalar_lea.vmem %s2, %s397
        %s399 = smul.u32 16, %s26
        %s400 = smul.u32 16, %s26
        %v402 = vld [vmem:[%s398] sm:$0xff]
        %v403 = vld [vmem:[%s398 + $0x8] sm:$0xff]
        %v404 = vld [vmem:[%s398 + $0x10] sm:$0xff]
        %v405 = vld [vmem:[%s398 + $0x18] sm:$0xff]
        %v406 = vld [vmem:[%s398 + $0x20] sm:$0xff]
        %v407 = vld [vmem:[%s398 + $0x28] sm:$0xff]
        %v408 = vld [vmem:[%s398 + $0x30] sm:$0xff]
        %v409 = vld [vmem:[%s398 + $0x38] sm:$0xff]
        %v410 = vld [vmem:[%s398 + $0x40] sm:$0xff]
        %v411 = vld [vmem:[%s398 + $0x48] sm:$0xff]
        %v412 = vld [vmem:[%s398 + $0x50] sm:$0xff]
        %v413 = vld [vmem:[%s398 + $0x58] sm:$0xff]
        %v414 = vld [vmem:[%s398 + $0x60] sm:$0xff]
        %v415 = vld [vmem:[%s398 + $0x68] sm:$0xff]
        %v416 = vld [vmem:[%s398 + $0x70] sm:$0xff]
        %v417 = vld [vmem:[%s398 + $0x78] sm:$0xff]
        loop: start=0, step=1, limit=49
        $region69: #{tpu_custom_call.1} parent=47 // loop_pre_header
          _
        $region70: #{tpu_custom_call.1} parent=47 // loop_header
          %s419 = sphi 0, %s423
          %p420 = scmp.ge.s32.totalorder %s419, 49
          %v424 = vphi 0.0, %v1331
          %v425 = vphi 0.0, %v1332
          %v426 = vphi 0.0, %v1333
          %v427 = vphi 0.0, %v1334
          %v428 = vphi 0.0, %v1335
          %v429 = vphi 0.0, %v1336
          %v430 = vphi 0.0, %v1337
          %v431 = vphi 0.0, %v1338
          %v432 = vphi 0.0, %v1339
          %v433 = vphi 0.0, %v1340
          %v434 = vphi 0.0, %v1341
          %v435 = vphi 0.0, %v1342
          %v436 = vphi 0.0, %v1343
          %v437 = vphi 0.0, %v1344
          %v438 = vphi 0.0, %v1345
          %v439 = vphi 0.0, %v1346
        $region71: #{tpu_custom_call.1} parent=47 // loop_header_branch
          %422 = sbr.rel (%p420) target = $region75
        $region72: #{tpu_custom_call.1} parent=47 // loop_body
          %s440 = smul.u32 %s419, 32
          %s441 = smul.addr %s440, 4
          %s442 = scalar_lea.vmem %s341, %s441 [#allocation2]
          %v443 = vld [vmem:[%s442] sm:$0xff]
          %v444 = vld [vmem:[%s442 + $0x8] sm:$0xff]
          %v445 = vld [vmem:[%s442 + $0x10] sm:$0xff]
          %v446 = vld [vmem:[%s442 + $0x18] sm:$0xff]
          %v447 = vld [vmem:[%s442 + $0x20] sm:$0xff]
          %v448 = vld [vmem:[%s442 + $0x28] sm:$0xff]
          %v449 = vld [vmem:[%s442 + $0x30] sm:$0xff]
          %v450 = vld [vmem:[%s442 + $0x38] sm:$0xff]
          %v451 = vld [vmem:[%s442 + $0x40] sm:$0xff]
          %v452 = vld [vmem:[%s442 + $0x48] sm:$0xff]
          %v453 = vld [vmem:[%s442 + $0x50] sm:$0xff]
          %v454 = vld [vmem:[%s442 + $0x58] sm:$0xff]
          %v455 = vld [vmem:[%s442 + $0x60] sm:$0xff]
          %v456 = vld [vmem:[%s442 + $0x68] sm:$0xff]
          %v457 = vld [vmem:[%s442 + $0x70] sm:$0xff]
          %v458 = vld [vmem:[%s442 + $0x78] sm:$0xff]
          %v459 = vld [vmem:[%s1] sm:$0xf]
          %v460 = vld [vmem:[%s1 + $0x4] sm:$0xf]
          %v461 = vld [vmem:[%s1 + $0x8] sm:$0xf]
          %v462 = vld [vmem:[%s1 + $0xc] sm:$0xf]
          %v463 = vld [vmem:[%s1 + $0x10] sm:$0xf]
          %v464 = vld [vmem:[%s1 + $0x14] sm:$0xf]
          %v465 = vld [vmem:[%s1 + $0x18] sm:$0xf]
          %v466 = vld [vmem:[%s1 + $0x1c] sm:$0xf]
          %v467 = vld [vmem:[%s1 + $0x20] sm:$0xf]
          %v468 = vld [vmem:[%s1 + $0x24] sm:$0xf]
          %v469 = vld [vmem:[%s1 + $0x28] sm:$0xf]
          %v470 = vld [vmem:[%s1 + $0x2c] sm:$0xf]
          %v471 = vld [vmem:[%s1 + $0x30] sm:$0xf]
          %v472 = vld [vmem:[%s1 + $0x34] sm:$0xf]
          %v473 = vld [vmem:[%s1 + $0x38] sm:$0xf]
          %v474 = vld [vmem:[%s1 + $0x3c] sm:$0xf]
          %v475 = vld [vmem:[%s1 + $0x40] sm:$0xf]
          %v476 = vld [vmem:[%s1 + $0x44] sm:$0xf]
          %v477 = vld [vmem:[%s1 + $0x48] sm:$0xf]
          %v478 = vld [vmem:[%s1 + $0x4c] sm:$0xf]
          %v479 = vld [vmem:[%s1 + $0x50] sm:$0xf]
          %v480 = vld [vmem:[%s1 + $0x54] sm:$0xf]
          %v481 = vld [vmem:[%s1 + $0x58] sm:$0xf]
          %v482 = vld [vmem:[%s1 + $0x5c] sm:$0xf]
          %v483 = vld [vmem:[%s1 + $0x60] sm:$0xf]
          %v484 = vld [vmem:[%s1 + $0x64] sm:$0xf]
          %v485 = vld [vmem:[%s1 + $0x68] sm:$0xf]
          %v486 = vld [vmem:[%s1 + $0x6c] sm:$0xf]
          %v487 = vld [vmem:[%s1 + $0x70] sm:$0xf]
          %v488 = vld [vmem:[%s1 + $0x74] sm:$0xf]
          %v489 = vld [vmem:[%s1 + $0x78] sm:$0xf]
          %v490 = vld [vmem:[%s1 + $0x7c] sm:$0xf]
          %v507 = vunpack.c.l.b16 %v443
          %v508 = vunpack.c.h.b16 %v443
          %v509 = vunpack.c.l.b16 %v444
          %v510 = vunpack.c.h.b16 %v444
          %v511 = vunpack.c.l.b16 %v445
          %v512 = vunpack.c.h.b16 %v445
          %v513 = vunpack.c.l.b16 %v446
          %v514 = vunpack.c.h.b16 %v446
          %v515 = vunpack.c.l.b16 %v447
          %v516 = vunpack.c.h.b16 %v447
          %v517 = vunpack.c.l.b16 %v448
          %v518 = vunpack.c.h.b16 %v448
          %v519 = vunpack.c.l.b16 %v449
          %v520 = vunpack.c.h.b16 %v449
          %v521 = vunpack.c.l.b16 %v450
          %v522 = vunpack.c.h.b16 %v450
          %v523 = vunpack.c.l.b16 %v451
          %v524 = vunpack.c.h.b16 %v451
          %v525 = vunpack.c.l.b16 %v452
          %v526 = vunpack.c.h.b16 %v452
          %v527 = vunpack.c.l.b16 %v453
          %v528 = vunpack.c.h.b16 %v453
          %v529 = vunpack.c.l.b16 %v454
          %v530 = vunpack.c.h.b16 %v454
          %v531 = vunpack.c.l.b16 %v455
          %v532 = vunpack.c.h.b16 %v455
          %v533 = vunpack.c.l.b16 %v456
          %v534 = vunpack.c.h.b16 %v456
          %v535 = vunpack.c.l.b16 %v457
          %v536 = vunpack.c.h.b16 %v457
          %v537 = vunpack.c.l.b16 %v458
          %v538 = vunpack.c.h.b16 %v458
          %v539 = vpack.c.b16 %v509, %v507
          %v540 = vpack.c.b16 %v510, %v508
          %v541 = vpack.c.b16 %v513, %v511
          %v542 = vpack.c.b16 %v514, %v512
          %v543 = vpack.c.b16 %v517, %v515
          %v544 = vpack.c.b16 %v518, %v516
          %v545 = vpack.c.b16 %v521, %v519
          %v546 = vpack.c.b16 %v522, %v520
          %v547 = vpack.c.b16 %v525, %v523
          %v548 = vpack.c.b16 %v526, %v524
          %v549 = vpack.c.b16 %v529, %v527
          %v550 = vpack.c.b16 %v530, %v528
          %v551 = vpack.c.b16 %v533, %v531
          %v552 = vpack.c.b16 %v534, %v532
          %v553 = vpack.c.b16 %v537, %v535
          %v554 = vpack.c.b16 %v538, %v536
          %v603 = vunpack.c.l.b16 %v459
          %v604 = vunpack.c.l.b16 %v460
          %v605 = vunpack.c.l.b16 %v461
          %v606 = vunpack.c.l.b16 %v462
          %v607 = vunpack.c.l.b16 %v463
          %v608 = vunpack.c.l.b16 %v464
          %v609 = vunpack.c.l.b16 %v465
          %v610 = vunpack.c.l.b16 %v466
          %v611 = vunpack.c.l.b16 %v467
          %v612 = vunpack.c.l.b16 %v468
          %v613 = vunpack.c.l.b16 %v469
          %v614 = vunpack.c.l.b16 %v470
          %v615 = vunpack.c.l.b16 %v471
          %v616 = vunpack.c.l.b16 %v472
          %v617 = vunpack.c.l.b16 %v473
          %v618 = vunpack.c.l.b16 %v474
          %v619 = vunpack.c.l.b16 %v475
          %v620 = vunpack.c.l.b16 %v476
          %v621 = vunpack.c.l.b16 %v477
          %v622 = vunpack.c.l.b16 %v478
          %v623 = vunpack.c.l.b16 %v479
          %v624 = vunpack.c.l.b16 %v480
          %v625 = vunpack.c.l.b16 %v481
          %v626 = vunpack.c.l.b16 %v482
          %v627 = vunpack.c.l.b16 %v483
          %v628 = vunpack.c.l.b16 %v484
          %v629 = vunpack.c.l.b16 %v485
          %v630 = vunpack.c.l.b16 %v486
          %v631 = vunpack.c.l.b16 %v487
          %v632 = vunpack.c.l.b16 %v488
          %v633 = vunpack.c.l.b16 %v489
          %v634 = vunpack.c.l.b16 %v490
          %v635 = vpack.c.b16 %v604, %v603
          %v636 = vpack.c.b16 %v606, %v605
          %v637 = vpack.c.b16 %v608, %v607
          %v638 = vpack.c.b16 %v610, %v609
          %v639 = vpack.c.b16 %v612, %v611
          %v640 = vpack.c.b16 %v614, %v613
          %v641 = vpack.c.b16 %v616, %v615
          %v642 = vpack.c.b16 %v618, %v617
          %v643 = vpack.c.b16 %v620, %v619
          %v644 = vpack.c.b16 %v622, %v621
          %v645 = vpack.c.b16 %v624, %v623
          %v646 = vpack.c.b16 %v626, %v625
          %v647 = vpack.c.b16 %v628, %v627
          %v648 = vpack.c.b16 %v630, %v629
          %v649 = vpack.c.b16 %v632, %v631
          %v650 = vpack.c.b16 %v634, %v633
          %667 = vmatprep.subr.bf16.mxu0 0
          %668 = vmatpush1.bf16.msra.mxu0 %v642
          %669 = vmatprep.subr.bf16.mxu0 0
          %670 = vmatpush1.bf16.msra.mxu0 %v641
          %671 = vmatprep.subr.bf16.mxu0 0
          %672 = vmatpush1.bf16.msra.mxu0 %v640
          %673 = vmatprep.subr.bf16.mxu0 0
          %674 = vmatpush1.bf16.msra.mxu0 %v639
          %675 = vmatprep.subr.bf16.mxu0 0
          %676 = vmatpush1.bf16.msra.mxu0 %v638
          %677 = vmatprep.subr.bf16.mxu0 0
          %678 = vmatpush1.bf16.msra.mxu0 %v637
          %679 = vmatprep.subr.bf16.mxu0 0
          %680 = vmatpush1.bf16.msra.mxu0 %v636
          %681 = vmatprep.subr.bf16.mxu0 0
          %682 = vmatpush1.bf16.msra.mxu0 %v635
          %683 = vmatprep.subr.bf16.mxu0 0
          %684 = vmatpush2.bf16.msra.mxu0 %v650
          %685 = vmatprep.subr.bf16.mxu0 0
          %686 = vmatpush2.bf16.msra.mxu0 %v649
          %687 = vmatprep.subr.bf16.mxu0 0
          %688 = vmatpush2.bf16.msra.mxu0 %v648
          %689 = vmatprep.subr.bf16.mxu0 0
          %690 = vmatpush2.bf16.msra.mxu0 %v647
          %691 = vmatprep.subr.bf16.mxu0 0
          %692 = vmatpush2.bf16.msra.mxu0 %v646
          %693 = vmatprep.subr.bf16.mxu0 0
          %694 = vmatpush2.bf16.msra.mxu0 %v645
          %695 = vmatprep.subr.bf16.mxu0 0
          %696 = vmatpush2.bf16.msra.mxu0 %v644
          %697 = vmatprep.subr.bf16.mxu0 0
          %698 = vmatpush2.bf16.msra.mxu0 %v643
          %699 = vmatprep.mubr.bf16.mxu0 %v540
          %700 = vmatmul.mubr.bf16.gmra.mxu0 %v539
          %v701 = vpop.f32.mrf.mxu0
          %v702 = vadd.f32 0.0, %v701
          %v703 = vpop.f32.mrf.mxu0
          %v704 = vpop.f32.mrf.mxu0
          %v705 = vadd.f32 0.0, %v704
          %v706 = vpop.f32.mrf.mxu0
          %707 = vmatprep.mubr.bf16.mxu0 %v542
          %708 = vmatmul.mubr.bf16.gmra.mxu0 %v541
          %v709 = vpop.f32.mrf.mxu0
          %v710 = vadd.f32 0.0, %v709
          %v711 = vpop.f32.mrf.mxu0
          %v712 = vpop.f32.mrf.mxu0
          %v713 = vadd.f32 0.0, %v712
          %v714 = vpop.f32.mrf.mxu0
          %715 = vmatprep.mubr.bf16.mxu0 %v544
          %716 = vmatmul.mubr.bf16.gmra.mxu0 %v543
          %v717 = vpop.f32.mrf.mxu0
          %v718 = vadd.f32 0.0, %v717
          %v719 = vpop.f32.mrf.mxu0
          %v720 = vpop.f32.mrf.mxu0
          %v721 = vadd.f32 0.0, %v720
          %v722 = vpop.f32.mrf.mxu0
          %723 = vmatprep.mubr.bf16.mxu0 %v546
          %724 = vmatmul.mubr.bf16.gmra.mxu0 %v545
          %v725 = vpop.f32.mrf.mxu0
          %v726 = vadd.f32 0.0, %v725
          %v727 = vpop.f32.mrf.mxu0
          %v728 = vpop.f32.mrf.mxu0
          %v729 = vadd.f32 0.0, %v728
          %v730 = vpop.f32.mrf.mxu0
          %731 = vmatprep.mubr.bf16.mxu0 %v548
          %732 = vmatmul.mubr.bf16.gmra.mxu0 %v547
          %v733 = vpop.f32.mrf.mxu0
          %v734 = vadd.f32 0.0, %v733
          %v735 = vpop.f32.mrf.mxu0
          %v736 = vpop.f32.mrf.mxu0
          %v737 = vadd.f32 0.0, %v736
          %v738 = vpop.f32.mrf.mxu0
          %739 = vmatprep.mubr.bf16.mxu0 %v550
          %740 = vmatmul.mubr.bf16.gmra.mxu0 %v549
          %v741 = vpop.f32.mrf.mxu0
          %v742 = vadd.f32 0.0, %v741
          %v743 = vpop.f32.mrf.mxu0
          %v744 = vpop.f32.mrf.mxu0
          %v745 = vadd.f32 0.0, %v744
          %v746 = vpop.f32.mrf.mxu0
          %747 = vmatprep.mubr.bf16.mxu0 %v552
          %748 = vmatmul.mubr.bf16.gmra.mxu0 %v551
          %v749 = vpop.f32.mrf.mxu0
          %v750 = vadd.f32 0.0, %v749
          %v751 = vpop.f32.mrf.mxu0
          %v752 = vpop.f32.mrf.mxu0
          %v753 = vadd.f32 0.0, %v752
          %v754 = vpop.f32.mrf.mxu0
          %755 = vmatprep.mubr.bf16.mxu0 %v554
          %756 = vmatmul.mubr.bf16.gmra.mxu0 %v553
          %v757 = vpop.f32.mrf.mxu0
          %v758 = vadd.f32 0.0, %v757
          %v759 = vpop.f32.mrf.mxu0
          %v760 = vpop.f32.mrf.mxu0
          %v761 = vadd.f32 0.0, %v760
          %v762 = vpop.f32.mrf.mxu0
          %763 = vdwg.mxu0
          %765 = vset.pattern.permute.xlu0 0
          %766 = vperm.xlu0 %765, %v402
          %v767 = vpop.permute.xlu0 %766
          %770 = vset.pattern.permute.xlu0 0
          %771 = vperm.xlu0 %770, %v403
          %v772 = vpop.permute.xlu0 %771
          %775 = vset.pattern.permute.xlu0 0
          %776 = vperm.xlu0 %775, %v404
          %v777 = vpop.permute.xlu0 %776
          %780 = vset.pattern.permute.xlu0 0
          %781 = vperm.xlu0 %780, %v405
          %v782 = vpop.permute.xlu0 %781
          %785 = vset.pattern.permute.xlu0 0
          %786 = vperm.xlu0 %785, %v406
          %v787 = vpop.permute.xlu0 %786
          %790 = vset.pattern.permute.xlu0 0
          %791 = vperm.xlu0 %790, %v407
          %v792 = vpop.permute.xlu0 %791
          %795 = vset.pattern.permute.xlu0 0
          %796 = vperm.xlu0 %795, %v408
          %v797 = vpop.permute.xlu0 %796
          %800 = vset.pattern.permute.xlu0 0
          %801 = vperm.xlu0 %800, %v409
          %v802 = vpop.permute.xlu0 %801
          %805 = vset.pattern.permute.xlu0 0
          %806 = vperm.xlu0 %805, %v410
          %v807 = vpop.permute.xlu0 %806
          %810 = vset.pattern.permute.xlu0 0
          %811 = vperm.xlu0 %810, %v411
          %v812 = vpop.permute.xlu0 %811
          %815 = vset.pattern.permute.xlu0 0
          %816 = vperm.xlu0 %815, %v412
          %v817 = vpop.permute.xlu0 %816
          %820 = vset.pattern.permute.xlu0 0
          %821 = vperm.xlu0 %820, %v413
          %v822 = vpop.permute.xlu0 %821
          %825 = vset.pattern.permute.xlu0 0
          %826 = vperm.xlu0 %825, %v414
          %v827 = vpop.permute.xlu0 %826
          %830 = vset.pattern.permute.xlu0 0
          %831 = vperm.xlu0 %830, %v415
          %v832 = vpop.permute.xlu0 %831
          %835 = vset.pattern.permute.xlu0 0
          %836 = vperm.xlu0 %835, %v416
          %v837 = vpop.permute.xlu0 %836
          %840 = vset.pattern.permute.xlu0 0
          %841 = vperm.xlu0 %840, %v417
          %v842 = vpop.permute.xlu0 %841
          %v844 = vmul.f32 %v767, %v702
          %v845 = vmul.f32 %v772, %v705
          %v846 = vmul.f32 %v777, %v710
          %v847 = vmul.f32 %v782, %v713
          %v848 = vmul.f32 %v787, %v718
          %v849 = vmul.f32 %v792, %v721
          %v850 = vmul.f32 %v797, %v726
          %v851 = vmul.f32 %v802, %v729
          %v852 = vmul.f32 %v807, %v734
          %v853 = vmul.f32 %v812, %v737
          %v854 = vmul.f32 %v817, %v742
          %v855 = vmul.f32 %v822, %v745
          %v856 = vmul.f32 %v827, %v750
          %v857 = vmul.f32 %v832, %v753
          %v858 = vmul.f32 %v837, %v758
          %v859 = vmul.f32 %v842, %v761
          %s860 = scalar_lea.vmem %s1, 128
          %v861 = vld [vmem:[%s860] sm:$0xf]
          %v862 = vld [vmem:[%s860 + $0x4] sm:$0xf]
          %v863 = vld [vmem:[%s860 + $0x8] sm:$0xf]
          %v864 = vld [vmem:[%s860 + $0xc] sm:$0xf]
          %v865 = vld [vmem:[%s860 + $0x10] sm:$0xf]
          %v866 = vld [vmem:[%s860 + $0x14] sm:$0xf]
          %v867 = vld [vmem:[%s860 + $0x18] sm:$0xf]
          %v868 = vld [vmem:[%s860 + $0x1c] sm:$0xf]
          %v869 = vld [vmem:[%s860 + $0x20] sm:$0xf]
          %v870 = vld [vmem:[%s860 + $0x24] sm:$0xf]
          %v871 = vld [vmem:[%s860 + $0x28] sm:$0xf]
          %v872 = vld [vmem:[%s860 + $0x2c] sm:$0xf]
          %v873 = vld [vmem:[%s860 + $0x30] sm:$0xf]
          %v874 = vld [vmem:[%s860 + $0x34] sm:$0xf]
          %v875 = vld [vmem:[%s860 + $0x38] sm:$0xf]
          %v876 = vld [vmem:[%s860 + $0x3c] sm:$0xf]
          %v877 = vld [vmem:[%s860 + $0x40] sm:$0xf]
          %v878 = vld [vmem:[%s860 + $0x44] sm:$0xf]
          %v879 = vld [vmem:[%s860 + $0x48] sm:$0xf]
          %v880 = vld [vmem:[%s860 + $0x4c] sm:$0xf]
          %v881 = vld [vmem:[%s860 + $0x50] sm:$0xf]
          %v882 = vld [vmem:[%s860 + $0x54] sm:$0xf]
          %v883 = vld [vmem:[%s860 + $0x58] sm:$0xf]
          %v884 = vld [vmem:[%s860 + $0x5c] sm:$0xf]
          %v885 = vld [vmem:[%s860 + $0x60] sm:$0xf]
          %v886 = vld [vmem:[%s860 + $0x64] sm:$0xf]
          %v887 = vld [vmem:[%s860 + $0x68] sm:$0xf]
          %v888 = vld [vmem:[%s860 + $0x6c] sm:$0xf]
          %v889 = vld [vmem:[%s860 + $0x70] sm:$0xf]
          %v890 = vld [vmem:[%s860 + $0x74] sm:$0xf]
          %v891 = vld [vmem:[%s860 + $0x78] sm:$0xf]
          %v892 = vld [vmem:[%s860 + $0x7c] sm:$0xf]
          %v925 = vunpack.c.l.b16 %v861
          %v926 = vunpack.c.l.b16 %v862
          %v927 = vunpack.c.l.b16 %v863
          %v928 = vunpack.c.l.b16 %v864
          %v929 = vunpack.c.l.b16 %v865
          %v930 = vunpack.c.l.b16 %v866
          %v931 = vunpack.c.l.b16 %v867
          %v932 = vunpack.c.l.b16 %v868
          %v933 = vunpack.c.l.b16 %v869
          %v934 = vunpack.c.l.b16 %v870
          %v935 = vunpack.c.l.b16 %v871
          %v936 = vunpack.c.l.b16 %v872
          %v937 = vunpack.c.l.b16 %v873
          %v938 = vunpack.c.l.b16 %v874
          %v939 = vunpack.c.l.b16 %v875
          %v940 = vunpack.c.l.b16 %v876
          %v941 = vunpack.c.l.b16 %v877
          %v942 = vunpack.c.l.b16 %v878
          %v943 = vunpack.c.l.b16 %v879
          %v944 = vunpack.c.l.b16 %v880
          %v945 = vunpack.c.l.b16 %v881
          %v946 = vunpack.c.l.b16 %v882
          %v947 = vunpack.c.l.b16 %v883
          %v948 = vunpack.c.l.b16 %v884
          %v949 = vunpack.c.l.b16 %v885
          %v950 = vunpack.c.l.b16 %v886
          %v951 = vunpack.c.l.b16 %v887
          %v952 = vunpack.c.l.b16 %v888
          %v953 = vunpack.c.l.b16 %v889
          %v954 = vunpack.c.l.b16 %v890
          %v955 = vunpack.c.l.b16 %v891
          %v956 = vunpack.c.l.b16 %v892
          %v957 = vpack.c.b16 %v926, %v925
          %v958 = vpack.c.b16 %v928, %v927
          %v959 = vpack.c.b16 %v930, %v929
          %v960 = vpack.c.b16 %v932, %v931
          %v961 = vpack.c.b16 %v934, %v933
          %v962 = vpack.c.b16 %v936, %v935
          %v963 = vpack.c.b16 %v938, %v937
          %v964 = vpack.c.b16 %v940, %v939
          %v965 = vpack.c.b16 %v942, %v941
          %v966 = vpack.c.b16 %v944, %v943
          %v967 = vpack.c.b16 %v946, %v945
          %v968 = vpack.c.b16 %v948, %v947
          %v969 = vpack.c.b16 %v950, %v949
          %v970 = vpack.c.b16 %v952, %v951
          %v971 = vpack.c.b16 %v954, %v953
          %v972 = vpack.c.b16 %v956, %v955
          %989 = vmatprep.subr.bf16.mxu0 0
          %990 = vmatpush1.bf16.msra.mxu0 %v964
          %991 = vmatprep.subr.bf16.mxu0 0
          %992 = vmatpush1.bf16.msra.mxu0 %v963
          %993 = vmatprep.subr.bf16.mxu0 0
          %994 = vmatpush1.bf16.msra.mxu0 %v962
          %995 = vmatprep.subr.bf16.mxu0 0
          %996 = vmatpush1.bf16.msra.mxu0 %v961
          %997 = vmatprep.subr.bf16.mxu0 0
          %998 = vmatpush1.bf16.msra.mxu0 %v960
          %999 = vmatprep.subr.bf16.mxu0 0
          %1000 = vmatpush1.bf16.msra.mxu0 %v959
          %1001 = vmatprep.subr.bf16.mxu0 0
          %1002 = vmatpush1.bf16.msra.mxu0 %v958
          %1003 = vmatprep.subr.bf16.mxu0 0
          %1004 = vmatpush1.bf16.msra.mxu0 %v957
          %1005 = vmatprep.subr.bf16.mxu0 0
          %1006 = vmatpush2.bf16.msra.mxu0 %v972
          %1007 = vmatprep.subr.bf16.mxu0 0
          %1008 = vmatpush2.bf16.msra.mxu0 %v971
          %1009 = vmatprep.subr.bf16.mxu0 0
          %1010 = vmatpush2.bf16.msra.mxu0 %v970
          %1011 = vmatprep.subr.bf16.mxu0 0
          %1012 = vmatpush2.bf16.msra.mxu0 %v969
          %1013 = vmatprep.subr.bf16.mxu0 0
          %1014 = vmatpush2.bf16.msra.mxu0 %v968
          %1015 = vmatprep.subr.bf16.mxu0 0
          %1016 = vmatpush2.bf16.msra.mxu0 %v967
          %1017 = vmatprep.subr.bf16.mxu0 0
          %1018 = vmatpush2.bf16.msra.mxu0 %v966
          %1019 = vmatprep.subr.bf16.mxu0 0
          %1020 = vmatpush2.bf16.msra.mxu0 %v965
          %1021 = vmatprep.mubr.bf16.mxu0 %v540
          %1022 = vmatmul.mubr.bf16.gmra.mxu0 %v539
          %v1023 = vpop.f32.mrf.mxu0
          %v1024 = vadd.f32 0.0, %v1023
          %v1025 = vpop.f32.mrf.mxu0
          %v1026 = vpop.f32.mrf.mxu0
          %v1027 = vadd.f32 0.0, %v1026
          %v1028 = vpop.f32.mrf.mxu0
          %1029 = vmatprep.mubr.bf16.mxu0 %v542
          %1030 = vmatmul.mubr.bf16.gmra.mxu0 %v541
          %v1031 = vpop.f32.mrf.mxu0
          %v1032 = vadd.f32 0.0, %v1031
          %v1033 = vpop.f32.mrf.mxu0
          %v1034 = vpop.f32.mrf.mxu0
          %v1035 = vadd.f32 0.0, %v1034
          %v1036 = vpop.f32.mrf.mxu0
          %1037 = vmatprep.mubr.bf16.mxu0 %v544
          %1038 = vmatmul.mubr.bf16.gmra.mxu0 %v543
          %v1039 = vpop.f32.mrf.mxu0
          %v1040 = vadd.f32 0.0, %v1039
          %v1041 = vpop.f32.mrf.mxu0
          %v1042 = vpop.f32.mrf.mxu0
          %v1043 = vadd.f32 0.0, %v1042
          %v1044 = vpop.f32.mrf.mxu0
          %1045 = vmatprep.mubr.bf16.mxu0 %v546
          %1046 = vmatmul.mubr.bf16.gmra.mxu0 %v545
          %v1047 = vpop.f32.mrf.mxu0
          %v1048 = vadd.f32 0.0, %v1047
          %v1049 = vpop.f32.mrf.mxu0
          %v1050 = vpop.f32.mrf.mxu0
          %v1051 = vadd.f32 0.0, %v1050
          %v1052 = vpop.f32.mrf.mxu0
          %1053 = vmatprep.mubr.bf16.mxu0 %v548
          %1054 = vmatmul.mubr.bf16.gmra.mxu0 %v547
          %v1055 = vpop.f32.mrf.mxu0
          %v1056 = vadd.f32 0.0, %v1055
          %v1057 = vpop.f32.mrf.mxu0
          %v1058 = vpop.f32.mrf.mxu0
          %v1059 = vadd.f32 0.0, %v1058
          %v1060 = vpop.f32.mrf.mxu0
          %1061 = vmatprep.mubr.bf16.mxu0 %v550
          %1062 = vmatmul.mubr.bf16.gmra.mxu0 %v549
          %v1063 = vpop.f32.mrf.mxu0
          %v1064 = vadd.f32 0.0, %v1063
          %v1065 = vpop.f32.mrf.mxu0
          %v1066 = vpop.f32.mrf.mxu0
          %v1067 = vadd.f32 0.0, %v1066
          %v1068 = vpop.f32.mrf.mxu0
          %1069 = vmatprep.mubr.bf16.mxu0 %v552
          %1070 = vmatmul.mubr.bf16.gmra.mxu0 %v551
          %v1071 = vpop.f32.mrf.mxu0
          %v1072 = vadd.f32 0.0, %v1071
          %v1073 = vpop.f32.mrf.mxu0
          %v1074 = vpop.f32.mrf.mxu0
          %v1075 = vadd.f32 0.0, %v1074
          %v1076 = vpop.f32.mrf.mxu0
          %1077 = vmatprep.mubr.bf16.mxu0 %v554
          %1078 = vmatmul.mubr.bf16.gmra.mxu0 %v553
          %v1079 = vpop.f32.mrf.mxu0
          %v1080 = vadd.f32 0.0, %v1079
          %v1081 = vpop.f32.mrf.mxu0
          %v1082 = vpop.f32.mrf.mxu0
          %v1083 = vadd.f32 0.0, %v1082
          %v1084 = vpop.f32.mrf.mxu0
          %1085 = vdwg.mxu0
          %1086 = vset.pattern.permute.xlu0 1
          %1087 = vperm.xlu0 %1086, %v402
          %v1088 = vpop.permute.xlu0 %1087
          %1090 = vset.pattern.permute.xlu0 1
          %1091 = vperm.xlu0 %1090, %v403
          %v1092 = vpop.permute.xlu0 %1091
          %1094 = vset.pattern.permute.xlu0 1
          %1095 = vperm.xlu0 %1094, %v404
          %v1096 = vpop.permute.xlu0 %1095
          %1098 = vset.pattern.permute.xlu0 1
          %1099 = vperm.xlu0 %1098, %v405
          %v1100 = vpop.permute.xlu0 %1099
          %1102 = vset.pattern.permute.xlu0 1
          %1103 = vperm.xlu0 %1102, %v406
          %v1104 = vpop.permute.xlu0 %1103
          %1106 = vset.pattern.permute.xlu0 1
          %1107 = vperm.xlu0 %1106, %v407
          %v1108 = vpop.permute.xlu0 %1107
          %1110 = vset.pattern.permute.xlu0 1
          %1111 = vperm.xlu0 %1110, %v408
          %v1112 = vpop.permute.xlu0 %1111
          %1114 = vset.pattern.permute.xlu0 1
          %1115 = vperm.xlu0 %1114, %v409
          %v1116 = vpop.permute.xlu0 %1115
          %1118 = vset.pattern.permute.xlu0 1
          %1119 = vperm.xlu0 %1118, %v410
          %v1120 = vpop.permute.xlu0 %1119
          %1122 = vset.pattern.permute.xlu0 1
          %1123 = vperm.xlu0 %1122, %v411
          %v1124 = vpop.permute.xlu0 %1123
          %1126 = vset.pattern.permute.xlu0 1
          %1127 = vperm.xlu0 %1126, %v412
          %v1128 = vpop.permute.xlu0 %1127
          %1130 = vset.pattern.permute.xlu0 1
          %1131 = vperm.xlu0 %1130, %v413
          %v1132 = vpop.permute.xlu0 %1131
          %1134 = vset.pattern.permute.xlu0 1
          %1135 = vperm.xlu0 %1134, %v414
          %v1136 = vpop.permute.xlu0 %1135
          %1138 = vset.pattern.permute.xlu0 1
          %1139 = vperm.xlu0 %1138, %v415
          %v1140 = vpop.permute.xlu0 %1139
          %1142 = vset.pattern.permute.xlu0 1
          %1143 = vperm.xlu0 %1142, %v416
          %v1144 = vpop.permute.xlu0 %1143
          %1146 = vset.pattern.permute.xlu0 1
          %1147 = vperm.xlu0 %1146, %v417
          %v1148 = vpop.permute.xlu0 %1147
          %v1150 = vmul.f32 %v1088, %v1024
          %v1151 = vmul.f32 %v1092, %v1027
          %v1152 = vmul.f32 %v1096, %v1032
          %v1153 = vmul.f32 %v1100, %v1035
          %v1154 = vmul.f32 %v1104, %v1040
          %v1155 = vmul.f32 %v1108, %v1043
          %v1156 = vmul.f32 %v1112, %v1048
          %v1157 = vmul.f32 %v1116, %v1051
          %v1158 = vmul.f32 %v1120, %v1056
          %v1159 = vmul.f32 %v1124, %v1059
          %v1160 = vmul.f32 %v1128, %v1064
          %v1161 = vmul.f32 %v1132, %v1067
          %v1162 = vmul.f32 %v1136, %v1072
          %v1163 = vmul.f32 %v1140, %v1075
          %v1164 = vmul.f32 %v1144, %v1080
          %v1165 = vmul.f32 %v1148, %v1083
          %v1166 = vadd.f32 %v844, %v1150
          %v1167 = vadd.f32 %v845, %v1151
          %v1168 = vadd.f32 %v846, %v1152
          %v1169 = vadd.f32 %v847, %v1153
          %v1170 = vadd.f32 %v848, %v1154
          %v1171 = vadd.f32 %v849, %v1155
          %v1172 = vadd.f32 %v850, %v1156
          %v1173 = vadd.f32 %v851, %v1157
          %v1174 = vadd.f32 %v852, %v1158
          %v1175 = vadd.f32 %v853, %v1159
          %v1176 = vadd.f32 %v854, %v1160
          %v1177 = vadd.f32 %v855, %v1161
          %v1178 = vadd.f32 %v856, %v1162
          %v1179 = vadd.f32 %v857, %v1163
          %v1180 = vadd.f32 %v858, %v1164
          %v1181 = vadd.f32 %v859, %v1165
          %v1182 = vpack.c.bf16 %v1167, %v1166
          %v1183 = vpack.c.bf16 %v1169, %v1168
          %v1184 = vpack.c.bf16 %v1171, %v1170
          %v1185 = vpack.c.bf16 %v1173, %v1172
          %v1186 = vpack.c.bf16 %v1175, %v1174
          %v1187 = vpack.c.bf16 %v1177, %v1176
          %v1188 = vpack.c.bf16 %v1179, %v1178
          %v1189 = vpack.c.bf16 %v1181, %v1180
          %s1190 = smul.u32 %s419, 4
          %s1191 = smul.addr %s1190, 4
          %s1192 = scalar_lea.vmem [#allocation5], %s1191
          %v1193 = vld [vmem:[%s1192] sm:$0xf]
          %v1194 = vld [vmem:[%s1192 + $0x4] sm:$0xf]
          %v1195 = vld [vmem:[%s1192 + $0x8] sm:$0xf]
          %v1196 = vld [vmem:[%s1192 + $0xc] sm:$0xf]
          %v1201 = vunpack.c.l.b16 %v1193
          %v1202 = vunpack.c.l.b16 %v1194
          %v1203 = vunpack.c.l.b16 %v1195
          %v1204 = vunpack.c.l.b16 %v1196
          %v1205 = vpack.c.b16 %v1202, %v1201
          %v1206 = vpack.c.b16 %v1204, %v1203
          %vm1209 = vcmask 261120
          %v1211 = vsel %vm1209, %v1182, 0
          %v1214 = vsel %vm1209, %v1183, 0
          %v1217 = vsel %vm1209, %v1184, 0
          %v1220 = vsel %vm1209, %v1185, 0
          %v1223 = vsel %vm1209, %v1186, 0
          %v1226 = vsel %vm1209, %v1187, 0
          %v1229 = vsel %vm1209, %v1188, 0
          %v1232 = vsel %vm1209, %v1189, 0
          %1234 = vmatprep.subr.bf16.mxu0 0
          %1235 = vmatpush1.bf16.msra.mxu0 0
          %1236 = vmatprep.subr.bf16.mxu0 0
          %1237 = vmatpush1.bf16.msra.mxu0 0
          %1238 = vmatprep.subr.bf16.mxu0 0
          %1239 = vmatpush1.bf16.msra.mxu0 0
          %1240 = vmatprep.subr.bf16.mxu0 0
          %1241 = vmatpush1.bf16.msra.mxu0 0
          %1242 = vmatprep.subr.bf16.mxu0 0
          %1243 = vmatpush1.bf16.msra.mxu0 0
          %1244 = vmatprep.subr.bf16.mxu0 0
          %1245 = vmatpush1.bf16.msra.mxu0 0
          %1246 = vmatprep.subr.bf16.mxu0 0
          %1247 = vmatpush1.bf16.msra.mxu0 %v1206
          %1248 = vmatprep.subr.bf16.mxu0 0
          %1249 = vmatpush1.bf16.msra.mxu0 %v1205
          %1250 = vmatprep.subr.bf16.mxu0 0
          %1251 = vmatpush2.bf16.msra.mxu0 0
          %1252 = vmatprep.subr.bf16.mxu0 0
          %1253 = vmatpush2.bf16.msra.mxu0 0
          %1254 = vmatprep.subr.bf16.mxu0 0
          %1255 = vmatpush2.bf16.msra.mxu0 0
          %1256 = vmatprep.subr.bf16.mxu0 0
          %1257 = vmatpush2.bf16.msra.mxu0 0
          %1258 = vmatprep.subr.bf16.mxu0 0
          %1259 = vmatpush2.bf16.msra.mxu0 0
          %1260 = vmatprep.subr.bf16.mxu0 0
          %1261 = vmatpush2.bf16.msra.mxu0 0
          %1262 = vmatprep.subr.bf16.mxu0 0
          %1263 = vmatpush2.bf16.msra.mxu0 0
          %1264 = vmatprep.subr.bf16.mxu0 0
          %1265 = vmatpush2.bf16.msra.mxu0 0
          %1266 = vmatprep.mubr.bf16.mxu0 0
          %1267 = vmatmul.mubr.bf16.gmra.mxu0 %v1211
          %v1268 = vpop.f32.mrf.mxu0
          %v1269 = vadd.f32 0.0, %v1268
          %v1270 = vpop.f32.mrf.mxu0
          %v1271 = vpop.f32.mrf.mxu0
          %v1272 = vadd.f32 0.0, %v1271
          %v1273 = vpop.f32.mrf.mxu0
          %1274 = vmatprep.mubr.bf16.mxu0 0
          %1275 = vmatmul.mubr.bf16.gmra.mxu0 %v1214
          %v1276 = vpop.f32.mrf.mxu0
          %v1277 = vadd.f32 0.0, %v1276
          %v1278 = vpop.f32.mrf.mxu0
          %v1279 = vpop.f32.mrf.mxu0
          %v1280 = vadd.f32 0.0, %v1279
          %v1281 = vpop.f32.mrf.mxu0
          %1282 = vmatprep.mubr.bf16.mxu0 0
          %1283 = vmatmul.mubr.bf16.gmra.mxu0 %v1217
          %v1284 = vpop.f32.mrf.mxu0
          %v1285 = vadd.f32 0.0, %v1284
          %v1286 = vpop.f32.mrf.mxu0
          %v1287 = vpop.f32.mrf.mxu0
          %v1288 = vadd.f32 0.0, %v1287
          %v1289 = vpop.f32.mrf.mxu0
          %1290 = vmatprep.mubr.bf16.mxu0 0
          %1291 = vmatmul.mubr.bf16.gmra.mxu0 %v1220
          %v1292 = vpop.f32.mrf.mxu0
          %v1293 = vadd.f32 0.0, %v1292
          %v1294 = vpop.f32.mrf.mxu0
          %v1295 = vpop.f32.mrf.mxu0
          %v1296 = vadd.f32 0.0, %v1295
          %v1297 = vpop.f32.mrf.mxu0
          %1298 = vmatprep.mubr.bf16.mxu0 0
          %1299 = vmatmul.mubr.bf16.gmra.mxu0 %v1223
          %v1300 = vpop.f32.mrf.mxu0
          %v1301 = vadd.f32 0.0, %v1300
          %v1302 = vpop.f32.mrf.mxu0
          %v1303 = vpop.f32.mrf.mxu0
          %v1304 = vadd.f32 0.0, %v1303
          %v1305 = vpop.f32.mrf.mxu0
          %1306 = vmatprep.mubr.bf16.mxu0 0
          %1307 = vmatmul.mubr.bf16.gmra.mxu0 %v1226
          %v1308 = vpop.f32.mrf.mxu0
          %v1309 = vadd.f32 0.0, %v1308
          %v1310 = vpop.f32.mrf.mxu0
          %v1311 = vpop.f32.mrf.mxu0
          %v1312 = vadd.f32 0.0, %v1311
          %v1313 = vpop.f32.mrf.mxu0
          %1314 = vmatprep.mubr.bf16.mxu0 0
          %1315 = vmatmul.mubr.bf16.gmra.mxu0 %v1229
          %v1316 = vpop.f32.mrf.mxu0
          %v1317 = vadd.f32 0.0, %v1316
          %v1318 = vpop.f32.mrf.mxu0
          %v1319 = vpop.f32.mrf.mxu0
          %v1320 = vadd.f32 0.0, %v1319
          %v1321 = vpop.f32.mrf.mxu0
          %1322 = vmatprep.mubr.bf16.mxu0 0
          %1323 = vmatmul.mubr.bf16.gmra.mxu0 %v1232
          %v1324 = vpop.f32.mrf.mxu0
          %v1325 = vadd.f32 0.0, %v1324
          %v1326 = vpop.f32.mrf.mxu0
          %v1327 = vpop.f32.mrf.mxu0
          %v1328 = vadd.f32 0.0, %v1327
          %v1329 = vpop.f32.mrf.mxu0
          %1330 = vdwg.mxu0
          %v1331 = vadd.f32 %v424, %v1269
          %v1332 = vadd.f32 %v425, %v1272
          %v1333 = vadd.f32 %v426, %v1277
          %v1334 = vadd.f32 %v427, %v1280
          %v1335 = vadd.f32 %v428, %v1285
          %v1336 = vadd.f32 %v429, %v1288
          %v1337 = vadd.f32 %v430, %v1293
          %v1338 = vadd.f32 %v431, %v1296
          %v1339 = vadd.f32 %v432, %v1301
          %v1340 = vadd.f32 %v433, %v1304
          %v1341 = vadd.f32 %v434, %v1309
          %v1342 = vadd.f32 %v435, %v1312
          %v1343 = vadd.f32 %v436, %v1317
          %v1344 = vadd.f32 %v437, %v1320
          %v1345 = vadd.f32 %v438, %v1325
          %v1346 = vadd.f32 %v439, %v1328
        $region73: #{tpu_custom_call.1} parent=47 // loop_footer
          %s423 = sadd.s32 1, %s419
        $region74: #{tpu_custom_call.1} parent=47 // loop_footer_branch
          %418 = sbr.rel target = $region70
        $region75: #{tpu_custom_call.1} parent=47 // loop_exit
          _
        %v1347 = vld [vmem:[#allocation7] sm:$0x1]
        %v1349 = vlaneseq
        %v1350 = vshrl.u32 %v1349, 7
        %v1351 = vsub.s32 0, %v1350
        %v1352 = vrot.slane %v1347, %v1351
        %v1354 = vadd.f32 %v424, %v1352
        %v1355 = vadd.f32 %v425, %v1352
        %v1356 = vadd.f32 %v426, %v1352
        %v1357 = vadd.f32 %v427, %v1352
        %v1358 = vadd.f32 %v428, %v1352
        %v1359 = vadd.f32 %v429, %v1352
        %v1360 = vadd.f32 %v430, %v1352
        %v1361 = vadd.f32 %v431, %v1352
        %v1362 = vadd.f32 %v432, %v1352
        %v1363 = vadd.f32 %v433, %v1352
        %v1364 = vadd.f32 %v434, %v1352
        %v1365 = vadd.f32 %v435, %v1352
        %v1366 = vadd.f32 %v436, %v1352
        %v1367 = vadd.f32 %v437, %v1352
        %v1368 = vadd.f32 %v438, %v1352
        %v1369 = vadd.f32 %v439, %v1352
        %v1370 = vmax.f32 %v1354, 0.0
        %v1371 = vmax.f32 %v1355, 0.0
        %v1372 = vmax.f32 %v1356, 0.0
        %v1373 = vmax.f32 %v1357, 0.0
        %v1374 = vmax.f32 %v1358, 0.0
        %v1375 = vmax.f32 %v1359, 0.0
        %v1376 = vmax.f32 %v1360, 0.0
        %v1377 = vmax.f32 %v1361, 0.0
        %v1378 = vmax.f32 %v1362, 0.0
        %v1379 = vmax.f32 %v1363, 0.0
        %v1380 = vmax.f32 %v1364, 0.0
        %v1381 = vmax.f32 %v1365, 0.0
        %v1382 = vmax.f32 %v1366, 0.0
        %v1383 = vmax.f32 %v1367, 0.0
        %v1384 = vmax.f32 %v1368, 0.0
        %v1385 = vmax.f32 %v1369, 0.0
        %v1386 = vpack.c.bf16 %v1371, %v1370
        %v1387 = vpack.c.bf16 %v1373, %v1372
        %v1388 = vpack.c.bf16 %v1375, %v1374
        %v1389 = vpack.c.bf16 %v1377, %v1376
        %v1390 = vpack.c.bf16 %v1379, %v1378
        %v1391 = vpack.c.bf16 %v1381, %v1380
        %v1392 = vpack.c.bf16 %v1383, %v1382
        %v1393 = vpack.c.bf16 %v1385, %v1384
        %v1394 = vld [vmem:[#allocation8] sm:$0xf]
        %v1395 = vld [vmem:[#allocation8 + $0x4] sm:$0xf]
        %v1396 = vld [vmem:[#allocation8 + $0x8] sm:$0xf]
        %v1397 = vld [vmem:[#allocation8 + $0xc] sm:$0xf]
        %v1398 = vld [vmem:[#allocation8 + $0x10] sm:$0xf]
        %v1399 = vld [vmem:[#allocation8 + $0x14] sm:$0xf]
        %v1400 = vld [vmem:[#allocation8 + $0x18] sm:$0xf]
        %v1401 = vld [vmem:[#allocation8 + $0x1c] sm:$0xf]
        %v1402 = vld [vmem:[#allocation8 + $0x20] sm:$0xf]
        %v1403 = vld [vmem:[#allocation8 + $0x24] sm:$0xf]
        %v1404 = vld [vmem:[#allocation8 + $0x28] sm:$0xf]
        %v1405 = vld [vmem:[#allocation8 + $0x2c] sm:$0xf]
        %v1406 = vld [vmem:[#allocation8 + $0x30] sm:$0xf]
        %v1407 = vld [vmem:[#allocation8 + $0x34] sm:$0xf]
        %v1408 = vld [vmem:[#allocation8 + $0x38] sm:$0xf]
        %v1409 = vld [vmem:[#allocation8 + $0x3c] sm:$0xf]
        %v1410 = vld [vmem:[#allocation10] sm:$0x1]
        %v1412 = vlaneseq
        %v1413 = vshrl.u32 %v1412, 7
        %v1414 = vsub.s32 0, %v1413
        %v1415 = vrot.slane %v1410, %v1414
        %v1433 = vunpack.c.l.b16 %v1394
        %v1434 = vunpack.c.l.b16 %v1395
        %v1435 = vunpack.c.l.b16 %v1396
        %v1436 = vunpack.c.l.b16 %v1397
        %v1437 = vunpack.c.l.b16 %v1398
        %v1438 = vunpack.c.l.b16 %v1399
        %v1439 = vunpack.c.l.b16 %v1400
        %v1440 = vunpack.c.l.b16 %v1401
        %v1441 = vunpack.c.l.b16 %v1402
        %v1442 = vunpack.c.l.b16 %v1403
        %v1443 = vunpack.c.l.b16 %v1404
        %v1444 = vunpack.c.l.b16 %v1405
        %v1445 = vunpack.c.l.b16 %v1406
        %v1446 = vunpack.c.l.b16 %v1407
        %v1447 = vunpack.c.l.b16 %v1408
        %v1448 = vunpack.c.l.b16 %v1409
        %v1449 = vpack.c.b16 %v1434, %v1433
        %v1450 = vpack.c.b16 %v1436, %v1435
        %v1451 = vpack.c.b16 %v1438, %v1437
        %v1452 = vpack.c.b16 %v1440, %v1439
        %v1453 = vpack.c.b16 %v1442, %v1441
        %v1454 = vpack.c.b16 %v1444, %v1443
        %v1455 = vpack.c.b16 %v1446, %v1445
        %v1456 = vpack.c.b16 %v1448, %v1447
        %1465 = vmatprep.subr.bf16.mxu0 0
        %1466 = vmatpush1.bf16.msra.mxu0 %v1456
        %1467 = vmatprep.subr.bf16.mxu0 0
        %1468 = vmatpush1.bf16.msra.mxu0 %v1455
        %1469 = vmatprep.subr.bf16.mxu0 0
        %1470 = vmatpush1.bf16.msra.mxu0 %v1454
        %1471 = vmatprep.subr.bf16.mxu0 0
        %1472 = vmatpush1.bf16.msra.mxu0 %v1453
        %1473 = vmatprep.subr.bf16.mxu0 0
        %1474 = vmatpush1.bf16.msra.mxu0 %v1452
        %1475 = vmatprep.subr.bf16.mxu0 0
        %1476 = vmatpush1.bf16.msra.mxu0 %v1451
        %1477 = vmatprep.subr.bf16.mxu0 0
        %1478 = vmatpush1.bf16.msra.mxu0 %v1450
        %1479 = vmatprep.subr.bf16.mxu0 0
        %1480 = vmatpush1.bf16.msra.mxu0 %v1449
        %1481 = vmatprep.subr.bf16.mxu0 0
        %1482 = vmatpush2.bf16.msra.mxu0 0
        %1483 = vmatprep.subr.bf16.mxu0 0
        %1484 = vmatpush2.bf16.msra.mxu0 0
        %1485 = vmatprep.subr.bf16.mxu0 0
        %1486 = vmatpush2.bf16.msra.mxu0 0
        %1487 = vmatprep.subr.bf16.mxu0 0
        %1488 = vmatpush2.bf16.msra.mxu0 0
        %1489 = vmatprep.subr.bf16.mxu0 0
        %1490 = vmatpush2.bf16.msra.mxu0 0
        %1491 = vmatprep.subr.bf16.mxu0 0
        %1492 = vmatpush2.bf16.msra.mxu0 0
        %1493 = vmatprep.subr.bf16.mxu0 0
        %1494 = vmatpush2.bf16.msra.mxu0 0
        %1495 = vmatprep.subr.bf16.mxu0 0
        %1496 = vmatpush2.bf16.msra.mxu0 0
        %1497 = vmatprep.mubr.bf16.mxu0 0
        %1498 = vmatmul.mubr.bf16.gmra.mxu0 %v1386
        %v1499 = vpop.f32.mrf.mxu0
        %v1500 = vadd.f32 %v1415, %v1499
        %v1501 = vpop.f32.mrf.mxu0
        %v1502 = vpop.f32.mrf.mxu0
        %v1503 = vadd.f32 %v1415, %v1502
        %v1504 = vpop.f32.mrf.mxu0
        %1505 = vmatprep.mubr.bf16.mxu0 0
        %1506 = vmatmul.mubr.bf16.gmra.mxu0 %v1387
        %v1507 = vpop.f32.mrf.mxu0
        %v1508 = vadd.f32 %v1415, %v1507
        %v1509 = vpop.f32.mrf.mxu0
        %v1510 = vpop.f32.mrf.mxu0
        %v1511 = vadd.f32 %v1415, %v1510
        %v1512 = vpop.f32.mrf.mxu0
        %1513 = vmatprep.mubr.bf16.mxu0 0
        %1514 = vmatmul.mubr.bf16.gmra.mxu0 %v1388
        %v1515 = vpop.f32.mrf.mxu0
        %v1516 = vadd.f32 %v1415, %v1515
        %v1517 = vpop.f32.mrf.mxu0
        %v1518 = vpop.f32.mrf.mxu0
        %v1519 = vadd.f32 %v1415, %v1518
        %v1520 = vpop.f32.mrf.mxu0
        %1521 = vmatprep.mubr.bf16.mxu0 0
        %1522 = vmatmul.mubr.bf16.gmra.mxu0 %v1389
        %v1523 = vpop.f32.mrf.mxu0
        %v1524 = vadd.f32 %v1415, %v1523
        %v1525 = vpop.f32.mrf.mxu0
        %v1526 = vpop.f32.mrf.mxu0
        %v1527 = vadd.f32 %v1415, %v1526
        %v1528 = vpop.f32.mrf.mxu0
        %1529 = vmatprep.mubr.bf16.mxu0 0
        %1530 = vmatmul.mubr.bf16.gmra.mxu0 %v1390
        %v1531 = vpop.f32.mrf.mxu0
        %v1532 = vadd.f32 %v1415, %v1531
        %v1533 = vpop.f32.mrf.mxu0
        %v1534 = vpop.f32.mrf.mxu0
        %v1535 = vadd.f32 %v1415, %v1534
        %v1536 = vpop.f32.mrf.mxu0
        %1537 = vmatprep.mubr.bf16.mxu0 0
        %1538 = vmatmul.mubr.bf16.gmra.mxu0 %v1391
        %v1539 = vpop.f32.mrf.mxu0
        %v1540 = vadd.f32 %v1415, %v1539
        %v1541 = vpop.f32.mrf.mxu0
        %v1542 = vpop.f32.mrf.mxu0
        %v1543 = vadd.f32 %v1415, %v1542
        %v1544 = vpop.f32.mrf.mxu0
        %1545 = vmatprep.mubr.bf16.mxu0 0
        %1546 = vmatmul.mubr.bf16.gmra.mxu0 %v1392
        %v1547 = vpop.f32.mrf.mxu0
        %v1548 = vadd.f32 %v1415, %v1547
        %v1549 = vpop.f32.mrf.mxu0
        %v1550 = vpop.f32.mrf.mxu0
        %v1551 = vadd.f32 %v1415, %v1550
        %v1552 = vpop.f32.mrf.mxu0
        %1553 = vmatprep.mubr.bf16.mxu0 0
        %1554 = vmatmul.mubr.bf16.gmra.mxu0 %v1393
        %v1555 = vpop.f32.mrf.mxu0
        %v1556 = vadd.f32 %v1415, %v1555
        %v1557 = vpop.f32.mrf.mxu0
        %v1558 = vpop.f32.mrf.mxu0
        %v1559 = vadd.f32 %v1415, %v1558
        %v1560 = vpop.f32.mrf.mxu0
        %1561 = vdwg.mxu0
        %v1562 = vmax.f32 %v1500, 0.0
        %v1563 = vmax.f32 %v1503, 0.0
        %v1564 = vmax.f32 %v1508, 0.0
        %v1565 = vmax.f32 %v1511, 0.0
        %v1566 = vmax.f32 %v1516, 0.0
        %v1567 = vmax.f32 %v1519, 0.0
        %v1568 = vmax.f32 %v1524, 0.0
        %v1569 = vmax.f32 %v1527, 0.0
        %v1570 = vmax.f32 %v1532, 0.0
        %v1571 = vmax.f32 %v1535, 0.0
        %v1572 = vmax.f32 %v1540, 0.0
        %v1573 = vmax.f32 %v1543, 0.0
        %v1574 = vmax.f32 %v1548, 0.0
        %v1575 = vmax.f32 %v1551, 0.0
        %v1576 = vmax.f32 %v1556, 0.0
        %v1577 = vmax.f32 %v1559, 0.0
        %1578 = vst [vmem:[%s392] sm:$0xff] %v1562
        %1579 = vst [vmem:[%s392 + $0x8] sm:$0xff] %v1563
        %1580 = vst [vmem:[%s392 + $0x10] sm:$0xff] %v1564
        %1581 = vst [vmem:[%s392 + $0x18] sm:$0xff] %v1565
        %1582 = vst [vmem:[%s392 + $0x20] sm:$0xff] %v1566
        %1583 = vst [vmem:[%s392 + $0x28] sm:$0xff] %v1567
        %1584 = vst [vmem:[%s392 + $0x30] sm:$0xff] %v1568
        %1585 = vst [vmem:[%s392 + $0x38] sm:$0xff] %v1569
        %1586 = vst [vmem:[%s392 + $0x40] sm:$0xff] %v1570
        %1587 = vst [vmem:[%s392 + $0x48] sm:$0xff] %v1571
        %1588 = vst [vmem:[%s392 + $0x50] sm:$0xff] %v1572
        %1589 = vst [vmem:[%s392 + $0x58] sm:$0xff] %v1573
        %1590 = vst [vmem:[%s392 + $0x60] sm:$0xff] %v1574
        %1591 = vst [vmem:[%s392 + $0x68] sm:$0xff] %v1575
        %1592 = vst [vmem:[%s392 + $0x70] sm:$0xff] %v1576
        %1593 = vst [vmem:[%s392 + $0x78] sm:$0xff] %v1577
        %s1594 = sand.u32 %s191, 1
        %s1595 = scalar_lea.sflag [#allocation4], %s1594
        %s1596 = sand.u32 %s191, 1
        %s1597 = smul.addr %s1596, 128
        %s1598 = scalar_lea.vmem [#allocation11], %s1597
        // Predicated region
        $region76: #{tpu_custom_call.1} parent=47 // pred_check
          %p1599 = pneg %p201
        $region77: #{tpu_custom_call.1} parent=47 // pred_check_branch
          %1601 = sbr.rel (%p1599) target = $region79
        $region78: #{tpu_custom_call.1} parent=47 // pred_region
          %s1602 = smul.u32 16, %s26
          %s1604 = ssub.s32 2048, 2048
          %1605 = vsyncadd %s1595, %s1604
          %s1606 = smul.addr %s1602, 128
          %s1607 = scalar_lea.hbm %s7, %s1606
          %s1608 = sshll.u32 %s1598, 4
          %s1609 = int_to_ptr.vmem [resolvable:$true] %s1608
          %1614 = dma.vmem_to_hbm [thread:$0]  %s1609, 2048, %s1607, %s1595, 128, 128, 8
        $region79: #{tpu_custom_call.1} parent=47 // pred_fallthru
          _
      $region48: #{tpu_custom_call.1} parent=5 // pred_fallthru
        _
      %p1615 = scmp.le.s32.totalorder 2, %s21
      // Predicated region
      $region80: #{tpu_custom_call.1} parent=5 // pred_check
        %p1616 = pneg %p1615
      $region81: #{tpu_custom_call.1} parent=5 // pred_check_branch
        %1618 = sbr.rel (%p1616) target = $region83
      $region82: #{tpu_custom_call.1} parent=5 // pred_region
        %s1619 = ssub.s32 %s21, 2
        // Predicated region
        $region84: #{tpu_custom_call.1} parent=82 // pred_check
          %p1620 = pneg %p207
        $region85: #{tpu_custom_call.1} parent=82 // pred_check_branch
          %1622 = sbr.rel (%p1620) target = $region87
        $region86: #{tpu_custom_call.1} parent=82 // pred_region
          %s1623 = sand.u32 %s192, 1
          %s1624 = scalar_lea.sflag [#allocation4], %s1623
          %s1625 = sand.u32 %s192, 1
          %s1626 = smul.addr %s1625, 128
          %s1627 = scalar_lea.vmem [#allocation11], %s1626
          %1628 = dma.done %s1624, 2048
        $region87: #{tpu_custom_call.1} parent=82 // pred_fallthru
          _
      $region83: #{tpu_custom_call.1} parent=5 // pred_fallthru
        _
    $region6: #{tpu_custom_call.1} parent=1 // loop_footer
      %s25 = sadd.s32 1, %s21
    $region7: #{tpu_custom_call.1} parent=1 // loop_footer_branch
      %20 = sbr.rel target = $region3
    $region8: #{tpu_custom_call.1} parent=1 // loop_exit
      _
    %1629 = vsyncpa [#allocation3], 1
    %s1630 = scalar_lea.sflag [#allocation3], 1
    %1631 = vsyncpa %s1630, 1
    %1632 = vsyncpa [#allocation6], 1
    %1633 = vsyncpa [#allocation9], 1
    %1634 = vsyncpa [#allocation4], 1
    %s1635 = scalar_lea.sflag [#allocation4], 1
    %1636 = vsyncpa %s1635, 1

</llo_original>
